<compile_context>
chip_gen: v7x
topology: tpu7x:2x2x1
jax: 0.10.0
libtpu: 0.0.40
codegen_flags: <defaults>
</compile_context>

<pallas_src>
import jax
import jax.numpy as jnp
from jax.experimental import pallas as pl
from jax.experimental.pallas import tpu as pltpu


def _pillar_vfe_kernel(feat_ref, npts_ref, out_ref):
    # feat_ref: (3, N, TM) f32   npts_ref: (1, TM) i32   out_ref: (7, TM) f32
    pts = feat_ref[...]                                          # (3, N, TM)
    npts = npts_ref[...]                                         # (1, TM)
    _, n_pts, tm = pts.shape

    nf = npts.astype(jnp.float32)                                # (1, TM)
    inv_n = 1.0 / nf                                             # one divide, reused 3x

    point_idx = jax.lax.broadcasted_iota(jnp.int32, (n_pts, tm), 0)
    mask = (point_idx < npts).astype(jnp.float32)                # (N, TM)

    valid = pts * mask[None, :, :]                               # (3, N, TM)
    points_mean = jnp.sum(valid, axis=1) * inv_n                 # (3, TM)
    rel = (valid - points_mean[:, None, :]) * mask[None, :, :]   # (3, N, TM)
    mean_rel = jnp.sum(rel, axis=1) * inv_n                      # (3, TM)
    variance = jnp.sum(rel * rel, axis=1) * inv_n                # (3, TM)

    # Pairwise max Euclidean distance (torch.cdist ** 2 under the hood),
    # computed per anchor row so no (N, N, TM) tensor is ever live.
    cx = valid[0]                                                # (N, TM)
    cy = valid[1]
    cz = valid[2]
    max_d2 = jnp.zeros((1, tm), jnp.float32)
    # N is static at trace time -> full static unroll of the anchor loop.
    # TODO(synk): optional j>i symmetry halving, only if slices stay 8-aligned.
    for i in range(n_pts):
        dxi = cx - cx[i:i + 1, :]                                # (N, TM)
        dyi = cy - cy[i:i + 1, :]
        dzi = cz - cz[i:i + 1, :]
        d2i = (dxi * dxi + dyi * dyi + dzi * dzi) * mask         # zero invalid j
        # Fold the anchor mask into the reduced row (max commutes with a
        # non-negative per-column scale) -> one (1,TM) mul instead of (N,TM).
        row_max = jnp.max(d2i, axis=0, keepdims=True) * mask[i:i + 1, :]
        max_d2 = jnp.maximum(max_d2, row_max)                    # (1, TM)
    max_dist = jnp.sqrt(max_d2)                                  # single sqrt, (1, TM)

    # statistical_features[:, 1:] *= ~(num_points == 1)
    keep = jnp.where(npts == 1, 0.0, 1.0)                        # (1, TM)
    # Direct sub-slice stores (no sublane concat temp).
    out_ref[0:1, :] = mean_rel[0:1, :]
    out_ref[1:3, :] = mean_rel[1:3, :] * keep
    out_ref[3:6, :] = variance * keep
    out_ref[6:7, :] = max_dist * keep


def pillar_vfe_forward(voxel_features, voxel_num_points, *, tile_m=512):
    """voxel_features: [M, N, C>=3] float, voxel_num_points: [M] int -> [M, 7]."""
    M, N, _ = voxel_features.shape

    # Keep >= 2 grid steps for small workloads (lets v7x split across its two
    # TensorCores) and avoid over-padding tiny M; lane width 128 is the floor.
    tm = tile_m
    while tm > 128 and pl.cdiv(M, tm) < 2:
        tm //= 2
    m_pad = pl.cdiv(M, tm) * tm
    n_pad = pl.cdiv(N, 8) * 8          # fully-populated sublanes

    # (M, N, C) -> (3, N, M): pillars on the 128-lane axis.
    pts = jnp.transpose(voxel_features[:, :, :3].astype(jnp.float32), (2, 1, 0))
    npts = voxel_num_points.astype(jnp.int32).reshape(1, M)
    if n_pad != N:
        pts = jnp.pad(pts, ((0, 0), (0, n_pad - N), (0, 0)))
    if m_pad != M:
        pts = jnp.pad(pts, ((0, 0), (0, 0), (0, m_pad - M)))
        # pad with n=1 so padded pillars never divide by zero
        npts = jnp.pad(npts, ((0, 0), (0, m_pad - M)), constant_values=1)

    out_t = pl.pallas_call(
        _pillar_vfe_kernel,
        out_shape=jax.ShapeDtypeStruct((7, m_pad), jnp.float32),
        grid_spec=pltpu.PrefetchScalarGridSpec(
            num_scalar_prefetch=0,
            grid=(m_pad // tm,),
            in_specs=[
                pl.BlockSpec((3, n_pad, tm), lambda i: (0, 0, i)),
                pl.BlockSpec((1, tm), lambda i: (0, i)),
            ],
            out_specs=pl.BlockSpec((7, tm), lambda i: (0, i)),
        ),
        compiler_params=pltpu.CompilerParams(
            dimension_semantics=("parallel",)),
    )(pts, npts)

    return jnp.transpose(out_t[:, :M], (1, 0))                   # (M, 7)


def _reference(voxel_features, voxel_num_points):
    """Pure-JAX mirror of the PyTorch forward for verification."""
    pts = voxel_features[:, :, :3].astype(jnp.float32)
    M, N, _ = pts.shape
    mask = (jnp.arange(N)[None, :] < voxel_num_points[:, None]).astype(jnp.float32)
    mask3 = mask[:, :, None]
    n = voxel_num_points.astype(jnp.float32)[:, None]
    valid = pts * mask3
    mean = valid.sum(1) / n
    rel = valid - mean[:, None, :]
    mean_rel = (rel * mask3).sum(1) / n
    var = ((rel * mask3) ** 2).sum(1) / n
    diff = valid[:, :, None, :] - valid[:, None, :, :]
    dist = jnp.sqrt((diff ** 2).sum(-1))
    dist = dist * (mask[:, :, None] * mask[:, None, :])
    maxd = dist.reshape(M, -1).max(1)[:, None]
    feats = jnp.concatenate([mean_rel, var, maxd], axis=1)
    keep = (voxel_num_points != 1).astype(jnp.float32)[:, None]
    feats = feats.at[:, 1:].multiply(keep)
    return feats


if __name__ == "__main__":
    key = jax.random.PRNGKey(0)
    k1, k2 = jax.random.split(key)

    M, N, C = 16, 32, 4   # M pillars, N max points/pillar, C raw point features
    voxel_features = jax.random.normal(k1, (M, N, C), dtype=jnp.float32) * 2.0
    voxel_num_points = jax.random.randint(k2, (M,), 1, N + 1, dtype=jnp.int32)

    out = pillar_vfe_forward(voxel_features, voxel_num_points)
    out = jax.block_until_ready(out)

    ref = _reference(voxel_features, voxel_num_points)
    assert out.shape == (M, 7), out.shape
    assert jnp.allclose(out, ref, atol=1e-4, rtol=1e-4), (
        f"max abs err {jnp.max(jnp.abs(out - ref))}")

    print("KERNEL_OK")
</pallas_src>

<mosaic_0001>
module attributes {stable_mosaic.version = 11 : i64} {
  func.func @_pillar_vfe_kernel(%arg0: i32, %arg1: memref<3x32x128xf32, #tpu.memory_space<vmem>>, %arg2: memref<1x128xi32, #tpu.memory_space<vmem>>, %arg3: memref<7x128xf32, #tpu.memory_space<vmem>>) attributes {dimension_semantics = [#tpu.dimension_semantics<parallel>], iteration_bounds = array<i64: 1>, scalar_prefetch = 0 : i64, scratch_operands = 0 : i64, tpu.core_type = #tpu.core_type<tc>, window_params = [{transform_indices = @transform_0, window_bounds = array<i64: 3, 32, 128>}, {transform_indices = @transform_1, window_bounds = array<i64: 1, 128>}, {transform_indices = @transform_2, window_bounds = array<i64: 7, 128>}]} {
    %c0 = arith.constant 0 : index
    %c0_0 = arith.constant 0 : index
    %c0_1 = arith.constant 0 : index
    %0 = vector.load %arg1[%c0, %c0_0, %c0_1] : memref<3x32x128xf32, #tpu.memory_space<vmem>>, vector<3x32x128xf32>
    %c0_2 = arith.constant 0 : index
    %c0_3 = arith.constant 0 : index
    %1 = vector.load %arg2[%c0_2, %c0_3] : memref<1x128xi32, #tpu.memory_space<vmem>>, vector<1x128xi32>
    %2 = arith.sitofp %1 : vector<1x128xi32> to vector<1x128xf32>
    %cst = arith.constant 1.000000e+00 : f32
    %3 = vector.broadcast %cst : f32 to vector<1x128xf32>
    %4 = arith.divf %3, %2 : vector<1x128xf32>
    %5 = tpu.iota {dimensions = array<i32: 0>} : vector<32x128xi32>
    %6 = vector.broadcast %1 : vector<1x128xi32> to vector<32x128xi32>
    %7 = arith.cmpi slt, %5, %6 : vector<32x128xi32>
    %8 = arith.extui %7 : vector<32x128xi1> to vector<32x128xi32>
    %9 = arith.sitofp %8 : vector<32x128xi32> to vector<32x128xf32>
    %10 = vector.shape_cast %9 : vector<32x128xf32> to vector<1x32x128xf32>
    %11 = vector.broadcast %10 : vector<1x32x128xf32> to vector<3x32x128xf32>
    %12 = arith.mulf %0, %11 : vector<3x32x128xf32>
    %cst_4 = arith.constant dense<0.000000e+00> : vector<3x128xf32>
    %13 = vector.multi_reduction <add>, %12, %cst_4 [1] : vector<3x32x128xf32> to vector<3x128xf32>
    %14 = vector.broadcast %4 : vector<1x128xf32> to vector<3x128xf32>
    %15 = arith.mulf %13, %14 : vector<3x128xf32>
    %16 = vector.shape_cast %15 : vector<3x128xf32> to vector<3x1x128xf32>
    %17 = vector.broadcast %16 : vector<3x1x128xf32> to vector<3x32x128xf32>
    %18 = arith.subf %12, %17 : vector<3x32x128xf32>
    %19 = vector.shape_cast %9 : vector<32x128xf32> to vector<1x32x128xf32>
    %20 = vector.broadcast %19 : vector<1x32x128xf32> to vector<3x32x128xf32>
    %21 = arith.mulf %18, %20 : vector<3x32x128xf32>
    %cst_5 = arith.constant dense<0.000000e+00> : vector<3x128xf32>
    %22 = vector.multi_reduction <add>, %21, %cst_5 [1] : vector<3x32x128xf32> to vector<3x128xf32>
    %23 = vector.broadcast %4 : vector<1x128xf32> to vector<3x128xf32>
    %24 = arith.mulf %22, %23 : vector<3x128xf32>
    %25 = arith.mulf %21, %21 : vector<3x32x128xf32>
    %cst_6 = arith.constant dense<0.000000e+00> : vector<3x128xf32>
    %26 = vector.multi_reduction <add>, %25, %cst_6 [1] : vector<3x32x128xf32> to vector<3x128xf32>
    %27 = vector.broadcast %4 : vector<1x128xf32> to vector<3x128xf32>
    %28 = arith.mulf %26, %27 : vector<3x128xf32>
    %29 = vector.extract_strided_slice %12 {offsets = [0, 0, 0], sizes = [1, 32, 128], strides = [1, 1, 1]} : vector<3x32x128xf32> to vector<1x32x128xf32>
    %30 = vector.shape_cast %29 : vector<1x32x128xf32> to vector<32x128xf32>
    %31 = vector.extract_strided_slice %12 {offsets = [1, 0, 0], sizes = [1, 32, 128], strides = [1, 1, 1]} : vector<3x32x128xf32> to vector<1x32x128xf32>
    %32 = vector.shape_cast %31 : vector<1x32x128xf32> to vector<32x128xf32>
    %33 = vector.extract_strided_slice %12 {offsets = [2, 0, 0], sizes = [1, 32, 128], strides = [1, 1, 1]} : vector<3x32x128xf32> to vector<1x32x128xf32>
    %34 = vector.shape_cast %33 : vector<1x32x128xf32> to vector<32x128xf32>
    %cst_7 = arith.constant 0.000000e+00 : f32
    %35 = vector.broadcast %cst_7 : f32 to vector<1x128xf32>
    %36 = vector.extract_strided_slice %30 {offsets = [0, 0], sizes = [1, 128], strides = [1, 1]} : vector<32x128xf32> to vector<1x128xf32>
    %37 = vector.broadcast %36 : vector<1x128xf32> to vector<32x128xf32>
    %38 = arith.subf %30, %37 : vector<32x128xf32>
    %39 = vector.extract_strided_slice %32 {offsets = [0, 0], sizes = [1, 128], strides = [1, 1]} : vector<32x128xf32> to vector<1x128xf32>
    %40 = vector.broadcast %39 : vector<1x128xf32> to vector<32x128xf32>
    %41 = arith.subf %32, %40 : vector<32x128xf32>
    %42 = vector.extract_strided_slice %34 {offsets = [0, 0], sizes = [1, 128], strides = [1, 1]} : vector<32x128xf32> to vector<1x128xf32>
    %43 = vector.broadcast %42 : vector<1x128xf32> to vector<32x128xf32>
    %44 = arith.subf %34, %43 : vector<32x128xf32>
    %45 = arith.mulf %38, %38 : vector<32x128xf32>
    %46 = arith.mulf %41, %41 : vector<32x128xf32>
    %47 = arith.addf %45, %46 : vector<32x128xf32>
    %48 = arith.mulf %44, %44 : vector<32x128xf32>
    %49 = arith.addf %47, %48 : vector<32x128xf32>
    %50 = arith.mulf %49, %9 : vector<32x128xf32>
    %cst_8 = arith.constant dense<0xFF800000> : vector<128xf32>
    %51 = vector.multi_reduction <maximumf>, %50, %cst_8 [0] : vector<32x128xf32> to vector<128xf32>
    %52 = vector.shape_cast %51 : vector<128xf32> to vector<1x128xf32>
    %53 = vector.extract_strided_slice %9 {offsets = [0, 0], sizes = [1, 128], strides = [1, 1]} : vector<32x128xf32> to vector<1x128xf32>
    %54 = arith.mulf %52, %53 : vector<1x128xf32>
    %55 = arith.maximumf %35, %54 : vector<1x128xf32>
    %56 = vector.extract_strided_slice %30 {offsets = [1, 0], sizes = [1, 128], strides = [1, 1]} : vector<32x128xf32> to vector<1x128xf32>
    %57 = vector.broadcast %56 : vector<1x128xf32> to vector<32x128xf32>
    %58 = arith.subf %30, %57 : vector<32x128xf32>
    %59 = vector.extract_strided_slice %32 {offsets = [1, 0], sizes = [1, 128], strides = [1, 1]} : vector<32x128xf32> to vector<1x128xf32>
    %60 = vector.broadcast %59 : vector<1x128xf32> to vector<32x128xf32>
    %61 = arith.subf %32, %60 : vector<32x128xf32>
    %62 = vector.extract_strided_slice %34 {offsets = [1, 0], sizes = [1, 128], strides = [1, 1]} : vector<32x128xf32> to vector<1x128xf32>
    %63 = vector.broadcast %62 : vector<1x128xf32> to vector<32x128xf32>
    %64 = arith.subf %34, %63 : vector<32x128xf32>
    %65 = arith.mulf %58, %58 : vector<32x128xf32>
    %66 = arith.mulf %61, %61 : vector<32x128xf32>
    %67 = arith.addf %65, %66 : vector<32x128xf32>
    %68 = arith.mulf %64, %64 : vector<32x128xf32>
    %69 = arith.addf %67, %68 : vector<32x128xf32>
    %70 = arith.mulf %69, %9 : vector<32x128xf32>
    %cst_9 = arith.constant dense<0xFF800000> : vector<128xf32>
    %71 = vector.multi_reduction <maximumf>, %70, %cst_9 [0] : vector<32x128xf32> to vector<128xf32>
    %72 = vector.shape_cast %71 : vector<128xf32> to vector<1x128xf32>
    %73 = vector.extract_strided_slice %9 {offsets = [1, 0], sizes = [1, 128], strides = [1, 1]} : vector<32x128xf32> to vector<1x128xf32>
    %74 = arith.mulf %72, %73 : vector<1x128xf32>
    %75 = arith.maximumf %55, %74 : vector<1x128xf32>
    %76 = vector.extract_strided_slice %30 {offsets = [2, 0], sizes = [1, 128], strides = [1, 1]} : vector<32x128xf32> to vector<1x128xf32>
    %77 = vector.broadcast %76 : vector<1x128xf32> to vector<32x128xf32>
    %78 = arith.subf %30, %77 : vector<32x128xf32>
    %79 = vector.extract_strided_slice %32 {offsets = [2, 0], sizes = [1, 128], strides = [1, 1]} : vector<32x128xf32> to vector<1x128xf32>
    %80 = vector.broadcast %79 : vector<1x128xf32> to vector<32x128xf32>
    %81 = arith.subf %32, %80 : vector<32x128xf32>
    %82 = vector.extract_strided_slice %34 {offsets = [2, 0], sizes = [1, 128], strides = [1, 1]} : vector<32x128xf32> to vector<1x128xf32>
    %83 = vector.broadcast %82 : vector<1x128xf32> to vector<32x128xf32>
    %84 = arith.subf %34, %83 : vector<32x128xf32>
    %85 = arith.mulf %78, %78 : vector<32x128xf32>
    %86 = arith.mulf %81, %81 : vector<32x128xf32>
    %87 = arith.addf %85, %86 : vector<32x128xf32>
    %88 = arith.mulf %84, %84 : vector<32x128xf32>
    %89 = arith.addf %87, %88 : vector<32x128xf32>
    %90 = arith.mulf %89, %9 : vector<32x128xf32>
    %cst_10 = arith.constant dense<0xFF800000> : vector<128xf32>
    %91 = vector.multi_reduction <maximumf>, %90, %cst_10 [0] : vector<32x128xf32> to vector<128xf32>
    %92 = vector.shape_cast %91 : vector<128xf32> to vector<1x128xf32>
    %93 = vector.extract_strided_slice %9 {offsets = [2, 0], sizes = [1, 128], strides = [1, 1]} : vector<32x128xf32> to vector<1x128xf32>
    %94 = arith.mulf %92, %93 : vector<1x128xf32>
    %95 = arith.maximumf %75, %94 : vector<1x128xf32>
    %96 = vector.extract_strided_slice %30 {offsets = [3, 0], sizes = [1, 128], strides = [1, 1]} : vector<32x128xf32> to vector<1x128xf32>
    %97 = vector.broadcast %96 : vector<1x128xf32> to vector<32x128xf32>
    %98 = arith.subf %30, %97 : vector<32x128xf32>
    %99 = vector.extract_strided_slice %32 {offsets = [3, 0], sizes = [1, 128], strides = [1, 1]} : vector<32x128xf32> to vector<1x128xf32>
    %100 = vector.broadcast %99 : vector<1x128xf32> to vector<32x128xf32>
    %101 = arith.subf %32, %100 : vector<32x128xf32>
    %102 = vector.extract_strided_slice %34 {offsets = [3, 0], sizes = [1, 128], strides = [1, 1]} : vector<32x128xf32> to vector<1x128xf32>
    %103 = vector.broadcast %102 : vector<1x128xf32> to vector<32x128xf32>
    %104 = arith.subf %34, %103 : vector<32x128xf32>
    %105 = arith.mulf %98, %98 : vector<32x128xf32>
    %106 = arith.mulf %101, %101 : vector<32x128xf32>
    %107 = arith.addf %105, %106 : vector<32x128xf32>
    %108 = arith.mulf %104, %104 : vector<32x128xf32>
    %109 = arith.addf %107, %108 : vector<32x128xf32>
    %110 = arith.mulf %109, %9 : vector<32x128xf32>
    %cst_11 = arith.constant dense<0xFF800000> : vector<128xf32>
    %111 = vector.multi_reduction <maximumf>, %110, %cst_11 [0] : vector<32x128xf32> to vector<128xf32>
    %112 = vector.shape_cast %111 : vector<128xf32> to vector<1x128xf32>
    %113 = vector.extract_strided_slice %9 {offsets = [3, 0], sizes = [1, 128], strides = [1, 1]} : vector<32x128xf32> to vector<1x128xf32>
    %114 = arith.mulf %112, %113 : vector<1x128xf32>
    %115 = arith.maximumf %95, %114 : vector<1x128xf32>
    %116 = vector.extract_strided_slice %30 {offsets = [4, 0], sizes = [1, 128], strides = [1, 1]} : vector<32x128xf32> to vector<1x128xf32>
    %117 = vector.broadcast %116 : vector<1x128xf32> to vector<32x128xf32>
    %118 = arith.subf %30, %117 : vector<32x128xf32>
    %119 = vector.extract_strided_slice %32 {offsets = [4, 0], sizes = [1, 128], strides = [1, 1]} : vector<32x128xf32> to vector<1x128xf32>
    %120 = vector.broadcast %119 : vector<1x128xf32> to vector<32x128xf32>
    %121 = arith.subf %32, %120 : vector<32x128xf32>
    %122 = vector.extract_strided_slice %34 {offsets = [4, 0], sizes = [1, 128], strides = [1, 1]} : vector<32x128xf32> to vector<1x128xf32>
    %123 = vector.broadcast %122 : vector<1x128xf32> to vector<32x128xf32>
    %124 = arith.subf %34, %123 : vector<32x128xf32>
    %125 = arith.mulf %118, %118 : vector<32x128xf32>
    %126 = arith.mulf %121, %121 : vector<32x128xf32>
    %127 = arith.addf %125, %126 : vector<32x128xf32>
    %128 = arith.mulf %124, %124 : vector<32x128xf32>
    %129 = arith.addf %127, %128 : vector<32x128xf32>
    %130 = arith.mulf %129, %9 : vector<32x128xf32>
    %cst_12 = arith.constant dense<0xFF800000> : vector<128xf32>
    %131 = vector.multi_reduction <maximumf>, %130, %cst_12 [0] : vector<32x128xf32> to vector<128xf32>
    %132 = vector.shape_cast %131 : vector<128xf32> to vector<1x128xf32>
    %133 = vector.extract_strided_slice %9 {offsets = [4, 0], sizes = [1, 128], strides = [1, 1]} : vector<32x128xf32> to vector<1x128xf32>
    %134 = arith.mulf %132, %133 : vector<1x128xf32>
    %135 = arith.maximumf %115, %134 : vector<1x128xf32>
    %136 = vector.extract_strided_slice %30 {offsets = [5, 0], sizes = [1, 128], strides = [1, 1]} : vector<32x128xf32> to vector<1x128xf32>
    %137 = vector.broadcast %136 : vector<1x128xf32> to vector<32x128xf32>
    %138 = arith.subf %30, %137 : vector<32x128xf32>
    %139 = vector.extract_strided_slice %32 {offsets = [5, 0], sizes = [1, 128], strides = [1, 1]} : vector<32x128xf32> to vector<1x128xf32>
    %140 = vector.broadcast %139 : vector<1x128xf32> to vector<32x128xf32>
    %141 = arith.subf %32, %140 : vector<32x128xf32>
    %142 = vector.extract_strided_slice %34 {offsets = [5, 0], sizes = [1, 128], strides = [1, 1]} : vector<32x128xf32> to vector<1x128xf32>
    %143 = vector.broadcast %142 : vector<1x128xf32> to vector<32x128xf32>
    %144 = arith.subf %34, %143 : vector<32x128xf32>
    %145 = arith.mulf %138, %138 : vector<32x128xf32>
    %146 = arith.mulf %141, %141 : vector<32x128xf32>
    %147 = arith.addf %145, %146 : vector<32x128xf32>
    %148 = arith.mulf %144, %144 : vector<32x128xf32>
    %149 = arith.addf %147, %148 : vector<32x128xf32>
    %150 = arith.mulf %149, %9 : vector<32x128xf32>
    %cst_13 = arith.constant dense<0xFF800000> : vector<128xf32>
    %151 = vector.multi_reduction <maximumf>, %150, %cst_13 [0] : vector<32x128xf32> to vector<128xf32>
    %152 = vector.shape_cast %151 : vector<128xf32> to vector<1x128xf32>
    %153 = vector.extract_strided_slice %9 {offsets = [5, 0], sizes = [1, 128], strides = [1, 1]} : vector<32x128xf32> to vector<1x128xf32>
    %154 = arith.mulf %152, %153 : vector<1x128xf32>
    %155 = arith.maximumf %135, %154 : vector<1x128xf32>
    %156 = vector.extract_strided_slice %30 {offsets = [6, 0], sizes = [1, 128], strides = [1, 1]} : vector<32x128xf32> to vector<1x128xf32>
    %157 = vector.broadcast %156 : vector<1x128xf32> to vector<32x128xf32>
    %158 = arith.subf %30, %157 : vector<32x128xf32>
    %159 = vector.extract_strided_slice %32 {offsets = [6, 0], sizes = [1, 128], strides = [1, 1]} : vector<32x128xf32> to vector<1x128xf32>
    %160 = vector.broadcast %159 : vector<1x128xf32> to vector<32x128xf32>
    %161 = arith.subf %32, %160 : vector<32x128xf32>
    %162 = vector.extract_strided_slice %34 {offsets = [6, 0], sizes = [1, 128], strides = [1, 1]} : vector<32x128xf32> to vector<1x128xf32>
    %163 = vector.broadcast %162 : vector<1x128xf32> to vector<32x128xf32>
    %164 = arith.subf %34, %163 : vector<32x128xf32>
    %165 = arith.mulf %158, %158 : vector<32x128xf32>
    %166 = arith.mulf %161, %161 : vector<32x128xf32>
    %167 = arith.addf %165, %166 : vector<32x128xf32>
    %168 = arith.mulf %164, %164 : vector<32x128xf32>
    %169 = arith.addf %167, %168 : vector<32x128xf32>
    %170 = arith.mulf %169, %9 : vector<32x128xf32>
    %cst_14 = arith.constant dense<0xFF800000> : vector<128xf32>
    %171 = vector.multi_reduction <maximumf>, %170, %cst_14 [0] : vector<32x128xf32> to vector<128xf32>
    %172 = vector.shape_cast %171 : vector<128xf32> to vector<1x128xf32>
    %173 = vector.extract_strided_slice %9 {offsets = [6, 0], sizes = [1, 128], strides = [1, 1]} : vector<32x128xf32> to vector<1x128xf32>
    %174 = arith.mulf %172, %173 : vector<1x128xf32>
    %175 = arith.maximumf %155, %174 : vector<1x128xf32>
    %176 = vector.extract_strided_slice %30 {offsets = [7, 0], sizes = [1, 128], strides = [1, 1]} : vector<32x128xf32> to vector<1x128xf32>
    %177 = vector.broadcast %176 : vector<1x128xf32> to vector<32x128xf32>
    %178 = arith.subf %30, %177 : vector<32x128xf32>
    %179 = vector.extract_strided_slice %32 {offsets = [7, 0], sizes = [1, 128], strides = [1, 1]} : vector<32x128xf32> to vector<1x128xf32>
    %180 = vector.broadcast %179 : vector<1x128xf32> to vector<32x128xf32>
    %181 = arith.subf %32, %180 : vector<32x128xf32>
    %182 = vector.extract_strided_slice %34 {offsets = [7, 0], sizes = [1, 128], strides = [1, 1]} : vector<32x128xf32> to vector<1x128xf32>
    %183 = vector.broadcast %182 : vector<1x128xf32> to vector<32x128xf32>
    %184 = arith.subf %34, %183 : vector<32x128xf32>
    %185 = arith.mulf %178, %178 : vector<32x128xf32>
    %186 = arith.mulf %181, %181 : vector<32x128xf32>
    %187 = arith.addf %185, %186 : vector<32x128xf32>
    %188 = arith.mulf %184, %184 : vector<32x128xf32>
    %189 = arith.addf %187, %188 : vector<32x128xf32>
    %190 = arith.mulf %189, %9 : vector<32x128xf32>
    %cst_15 = arith.constant dense<0xFF800000> : vector<128xf32>
    %191 = vector.multi_reduction <maximumf>, %190, %cst_15 [0] : vector<32x128xf32> to vector<128xf32>
    %192 = vector.shape_cast %191 : vector<128xf32> to vector<1x128xf32>
    %193 = vector.extract_strided_slice %9 {offsets = [7, 0], sizes = [1, 128], strides = [1, 1]} : vector<32x128xf32> to vector<1x128xf32>
    %194 = arith.mulf %192, %193 : vector<1x128xf32>
    %195 = arith.maximumf %175, %194 : vector<1x128xf32>
    %196 = vector.extract_strided_slice %30 {offsets = [8, 0], sizes = [1, 128], strides = [1, 1]} : vector<32x128xf32> to vector<1x128xf32>
    %197 = vector.broadcast %196 : vector<1x128xf32> to vector<32x128xf32>
    %198 = arith.subf %30, %197 : vector<32x128xf32>
    %199 = vector.extract_strided_slice %32 {offsets = [8, 0], sizes = [1, 128], strides = [1, 1]} : vector<32x128xf32> to vector<1x128xf32>
    %200 = vector.broadcast %199 : vector<1x128xf32> to vector<32x128xf32>
    %201 = arith.subf %32, %200 : vector<32x128xf32>
    %202 = vector.extract_strided_slice %34 {offsets = [8, 0], sizes = [1, 128], strides = [1, 1]} : vector<32x128xf32> to vector<1x128xf32>
    %203 = vector.broadcast %202 : vector<1x128xf32> to vector<32x128xf32>
    %204 = arith.subf %34, %203 : vector<32x128xf32>
    %205 = arith.mulf %198, %198 : vector<32x128xf32>
    %206 = arith.mulf %201, %201 : vector<32x128xf32>
    %207 = arith.addf %205, %206 : vector<32x128xf32>
    %208 = arith.mulf %204, %204 : vector<32x128xf32>
    %209 = arith.addf %207, %208 : vector<32x128xf32>
    %210 = arith.mulf %209, %9 : vector<32x128xf32>
    %cst_16 = arith.constant dense<0xFF800000> : vector<128xf32>
    %211 = vector.multi_reduction <maximumf>, %210, %cst_16 [0] : vector<32x128xf32> to vector<128xf32>
    %212 = vector.shape_cast %211 : vector<128xf32> to vector<1x128xf32>
    %213 = vector.extract_strided_slice %9 {offsets = [8, 0], sizes = [1, 128], strides = [1, 1]} : vector<32x128xf32> to vector<1x128xf32>
    %214 = arith.mulf %212, %213 : vector<1x128xf32>
    %215 = arith.maximumf %195, %214 : vector<1x128xf32>
    %216 = vector.extract_strided_slice %30 {offsets = [9, 0], sizes = [1, 128], strides = [1, 1]} : vector<32x128xf32> to vector<1x128xf32>
    %217 = vector.broadcast %216 : vector<1x128xf32> to vector<32x128xf32>
    %218 = arith.subf %30, %217 : vector<32x128xf32>
    %219 = vector.extract_strided_slice %32 {offsets = [9, 0], sizes = [1, 128], strides = [1, 1]} : vector<32x128xf32> to vector<1x128xf32>
    %220 = vector.broadcast %219 : vector<1x128xf32> to vector<32x128xf32>
    %221 = arith.subf %32, %220 : vector<32x128xf32>
    %222 = vector.extract_strided_slice %34 {offsets = [9, 0], sizes = [1, 128], strides = [1, 1]} : vector<32x128xf32> to vector<1x128xf32>
    %223 = vector.broadcast %222 : vector<1x128xf32> to vector<32x128xf32>
    %224 = arith.subf %34, %223 : vector<32x128xf32>
    %225 = arith.mulf %218, %218 : vector<32x128xf32>
    %226 = arith.mulf %221, %221 : vector<32x128xf32>
    %227 = arith.addf %225, %226 : vector<32x128xf32>
    %228 = arith.mulf %224, %224 : vector<32x128xf32>
    %229 = arith.addf %227, %228 : vector<32x128xf32>
    %230 = arith.mulf %229, %9 : vector<32x128xf32>
    %cst_17 = arith.constant dense<0xFF800000> : vector<128xf32>
    %231 = vector.multi_reduction <maximumf>, %230, %cst_17 [0] : vector<32x128xf32> to vector<128xf32>
    %232 = vector.shape_cast %231 : vector<128xf32> to vector<1x128xf32>
    %233 = vector.extract_strided_slice %9 {offsets = [9, 0], sizes = [1, 128], strides = [1, 1]} : vector<32x128xf32> to vector<1x128xf32>
    %234 = arith.mulf %232, %233 : vector<1x128xf32>
    %235 = arith.maximumf %215, %234 : vector<1x128xf32>
    %236 = vector.extract_strided_slice %30 {offsets = [10, 0], sizes = [1, 128], strides = [1, 1]} : vector<32x128xf32> to vector<1x128xf32>
    %237 = vector.broadcast %236 : vector<1x128xf32> to vector<32x128xf32>
    %238 = arith.subf %30, %237 : vector<32x128xf32>
    %239 = vector.extract_strided_slice %32 {offsets = [10, 0], sizes = [1, 128], strides = [1, 1]} : vector<32x128xf32> to vector<1x128xf32>
    %240 = vector.broadcast %239 : vector<1x128xf32> to vector<32x128xf32>
    %241 = arith.subf %32, %240 : vector<32x128xf32>
    %242 = vector.extract_strided_slice %34 {offsets = [10, 0], sizes = [1, 128], strides = [1, 1]} : vector<32x128xf32> to vector<1x128xf32>
    %243 = vector.broadcast %242 : vector<1x128xf32> to vector<32x128xf32>
    %244 = arith.subf %34, %243 : vector<32x128xf32>
    %245 = arith.mulf %238, %238 : vector<32x128xf32>
    %246 = arith.mulf %241, %241 : vector<32x128xf32>
    %247 = arith.addf %245, %246 : vector<32x128xf32>
    %248 = arith.mulf %244, %244 : vector<32x128xf32>
    %249 = arith.addf %247, %248 : vector<32x128xf32>
    %250 = arith.mulf %249, %9 : vector<32x128xf32>
    %cst_18 = arith.constant dense<0xFF800000> : vector<128xf32>
    %251 = vector.multi_reduction <maximumf>, %250, %cst_18 [0] : vector<32x128xf32> to vector<128xf32>
    %252 = vector.shape_cast %251 : vector<128xf32> to vector<1x128xf32>
    %253 = vector.extract_strided_slice %9 {offsets = [10, 0], sizes = [1, 128], strides = [1, 1]} : vector<32x128xf32> to vector<1x128xf32>
    %254 = arith.mulf %252, %253 : vector<1x128xf32>
    %255 = arith.maximumf %235, %254 : vector<1x128xf32>
    %256 = vector.extract_strided_slice %30 {offsets = [11, 0], sizes = [1, 128], strides = [1, 1]} : vector<32x128xf32> to vector<1x128xf32>
    %257 = vector.broadcast %256 : vector<1x128xf32> to vector<32x128xf32>
    %258 = arith.subf %30, %257 : vector<32x128xf32>
    %259 = vector.extract_strided_slice %32 {offsets = [11, 0], sizes = [1, 128], strides = [1, 1]} : vector<32x128xf32> to vector<1x128xf32>
    %260 = vector.broadcast %259 : vector<1x128xf32> to vector<32x128xf32>
    %261 = arith.subf %32, %260 : vector<32x128xf32>
    %262 = vector.extract_strided_slice %34 {offsets = [11, 0], sizes = [1, 128], strides = [1, 1]} : vector<32x128xf32> to vector<1x128xf32>
    %263 = vector.broadcast %262 : vector<1x128xf32> to vector<32x128xf32>
    %264 = arith.subf %34, %263 : vector<32x128xf32>
    %265 = arith.mulf %258, %258 : vector<32x128xf32>
    %266 = arith.mulf %261, %261 : vector<32x128xf32>
    %267 = arith.addf %265, %266 : vector<32x128xf32>
    %268 = arith.mulf %264, %264 : vector<32x128xf32>
    %269 = arith.addf %267, %268 : vector<32x128xf32>
    %270 = arith.mulf %269, %9 : vector<32x128xf32>
    %cst_19 = arith.constant dense<0xFF800000> : vector<128xf32>
    %271 = vector.multi_reduction <maximumf>, %270, %cst_19 [0] : vector<32x128xf32> to vector<128xf32>
    %272 = vector.shape_cast %271 : vector<128xf32> to vector<1x128xf32>
    %273 = vector.extract_strided_slice %9 {offsets = [11, 0], sizes = [1, 128], strides = [1, 1]} : vector<32x128xf32> to vector<1x128xf32>
    %274 = arith.mulf %272, %273 : vector<1x128xf32>
    %275 = arith.maximumf %255, %274 : vector<1x128xf32>
    %276 = vector.extract_strided_slice %30 {offsets = [12, 0], sizes = [1, 128], strides = [1, 1]} : vector<32x128xf32> to vector<1x128xf32>
    %277 = vector.broadcast %276 : vector<1x128xf32> to vector<32x128xf32>
    %278 = arith.subf %30, %277 : vector<32x128xf32>
    %279 = vector.extract_strided_slice %32 {offsets = [12, 0], sizes = [1, 128], strides = [1, 1]} : vector<32x128xf32> to vector<1x128xf32>
    %280 = vector.broadcast %279 : vector<1x128xf32> to vector<32x128xf32>
    %281 = arith.subf %32, %280 : vector<32x128xf32>
    %282 = vector.extract_strided_slice %34 {offsets = [12, 0], sizes = [1, 128], strides = [1, 1]} : vector<32x128xf32> to vector<1x128xf32>
    %283 = vector.broadcast %282 : vector<1x128xf32> to vector<32x128xf32>
    %284 = arith.subf %34, %283 : vector<32x128xf32>
    %285 = arith.mulf %278, %278 : vector<32x128xf32>
    %286 = arith.mulf %281, %281 : vector<32x128xf32>
    %287 = arith.addf %285, %286 : vector<32x128xf32>
    %288 = arith.mulf %284, %284 : vector<32x128xf32>
    %289 = arith.addf %287, %288 : vector<32x128xf32>
    %290 = arith.mulf %289, %9 : vector<32x128xf32>
    %cst_20 = arith.constant dense<0xFF800000> : vector<128xf32>
    %291 = vector.multi_reduction <maximumf>, %290, %cst_20 [0] : vector<32x128xf32> to vector<128xf32>
    %292 = vector.shape_cast %291 : vector<128xf32> to vector<1x128xf32>
    %293 = vector.extract_strided_slice %9 {offsets = [12, 0], sizes = [1, 128], strides = [1, 1]} : vector<32x128xf32> to vector<1x128xf32>
    %294 = arith.mulf %292, %293 : vector<1x128xf32>
    %295 = arith.maximumf %275, %294 : vector<1x128xf32>
    %296 = vector.extract_strided_slice %30 {offsets = [13, 0], sizes = [1, 128], strides = [1, 1]} : vector<32x128xf32> to vector<1x128xf32>
    %297 = vector.broadcast %296 : vector<1x128xf32> to vector<32x128xf32>
    %298 = arith.subf %30, %297 : vector<32x128xf32>
    %299 = vector.extract_strided_slice %32 {offsets = [13, 0], sizes = [1, 128], strides = [1, 1]} : vector<32x128xf32> to vector<1x128xf32>
    %300 = vector.broadcast %299 : vector<1x128xf32> to vector<32x128xf32>
    %301 = arith.subf %32, %300 : vector<32x128xf32>
    %302 = vector.extract_strided_slice %34 {offsets = [13, 0], sizes = [1, 128], strides = [1, 1]} : vector<32x128xf32> to vector<1x128xf32>
    %303 = vector.broadcast %302 : vector<1x128xf32> to vector<32x128xf32>
    %304 = arith.subf %34, %303 : vector<32x128xf32>
    %305 = arith.mulf %298, %298 : vector<32x128xf32>
    %306 = arith.mulf %301, %301 : vector<32x128xf32>
    %307 = arith.addf %305, %306 : vector<32x128xf32>
    %308 = arith.mulf %304, %304 : vector<32x128xf32>
    %309 = arith.addf %307, %308 : vector<32x128xf32>
    %310 = arith.mulf %309, %9 : vector<32x128xf32>
    %cst_21 = arith.constant dense<0xFF800000> : vector<128xf32>
    %311 = vector.multi_reduction <maximumf>, %310, %cst_21 [0] : vector<32x128xf32> to vector<128xf32>
    %312 = vector.shape_cast %311 : vector<128xf32> to vector<1x128xf32>
    %313 = vector.extract_strided_slice %9 {offsets = [13, 0], sizes = [1, 128], strides = [1, 1]} : vector<32x128xf32> to vector<1x128xf32>
    %314 = arith.mulf %312, %313 : vector<1x128xf32>
    %315 = arith.maximumf %295, %314 : vector<1x128xf32>
    %316 = vector.extract_strided_slice %30 {offsets = [14, 0], sizes = [1, 128], strides = [1, 1]} : vector<32x128xf32> to vector<1x128xf32>
    %317 = vector.broadcast %316 : vector<1x128xf32> to vector<32x128xf32>
    %318 = arith.subf %30, %317 : vector<32x128xf32>
    %319 = vector.extract_strided_slice %32 {offsets = [14, 0], sizes = [1, 128], strides = [1, 1]} : vector<32x128xf32> to vector<1x128xf32>
    %320 = vector.broadcast %319 : vector<1x128xf32> to vector<32x128xf32>
    %321 = arith.subf %32, %320 : vector<32x128xf32>
    %322 = vector.extract_strided_slice %34 {offsets = [14, 0], sizes = [1, 128], strides = [1, 1]} : vector<32x128xf32> to vector<1x128xf32>
    %323 = vector.broadcast %322 : vector<1x128xf32> to vector<32x128xf32>
    %324 = arith.subf %34, %323 : vector<32x128xf32>
    %325 = arith.mulf %318, %318 : vector<32x128xf32>
    %326 = arith.mulf %321, %321 : vector<32x128xf32>
    %327 = arith.addf %325, %326 : vector<32x128xf32>
    %328 = arith.mulf %324, %324 : vector<32x128xf32>
    %329 = arith.addf %327, %328 : vector<32x128xf32>
    %330 = arith.mulf %329, %9 : vector<32x128xf32>
    %cst_22 = arith.constant dense<0xFF800000> : vector<128xf32>
    %331 = vector.multi_reduction <maximumf>, %330, %cst_22 [0] : vector<32x128xf32> to vector<128xf32>
    %332 = vector.shape_cast %331 : vector<128xf32> to vector<1x128xf32>
    %333 = vector.extract_strided_slice %9 {offsets = [14, 0], sizes = [1, 128], strides = [1, 1]} : vector<32x128xf32> to vector<1x128xf32>
    %334 = arith.mulf %332, %333 : vector<1x128xf32>
    %335 = arith.maximumf %315, %334 : vector<1x128xf32>
    %336 = vector.extract_strided_slice %30 {offsets = [15, 0], sizes = [1, 128], strides = [1, 1]} : vector<32x128xf32> to vector<1x128xf32>
    %337 = vector.broadcast %336 : vector<1x128xf32> to vector<32x128xf32>
    %338 = arith.subf %30, %337 : vector<32x128xf32>
    %339 = vector.extract_strided_slice %32 {offsets = [15, 0], sizes = [1, 128], strides = [1, 1]} : vector<32x128xf32> to vector<1x128xf32>
    %340 = vector.broadcast %339 : vector<1x128xf32> to vector<32x128xf32>
    %341 = arith.subf %32, %340 : vector<32x128xf32>
    %342 = vector.extract_strided_slice %34 {offsets = [15, 0], sizes = [1, 128], strides = [1, 1]} : vector<32x128xf32> to vector<1x128xf32>
    %343 = vector.broadcast %342 : vector<1x128xf32> to vector<32x128xf32>
    %344 = arith.subf %34, %343 : vector<32x128xf32>
    %345 = arith.mulf %338, %338 : vector<32x128xf32>
    %346 = arith.mulf %341, %341 : vector<32x128xf32>
    %347 = arith.addf %345, %346 : vector<32x128xf32>
    %348 = arith.mulf %344, %344 : vector<32x128xf32>
    %349 = arith.addf %347, %348 : vector<32x128xf32>
    %350 = arith.mulf %349, %9 : vector<32x128xf32>
    %cst_23 = arith.constant dense<0xFF800000> : vector<128xf32>
    %351 = vector.multi_reduction <maximumf>, %350, %cst_23 [0] : vector<32x128xf32> to vector<128xf32>
    %352 = vector.shape_cast %351 : vector<128xf32> to vector<1x128xf32>
    %353 = vector.extract_strided_slice %9 {offsets = [15, 0], sizes = [1, 128], strides = [1, 1]} : vector<32x128xf32> to vector<1x128xf32>
    %354 = arith.mulf %352, %353 : vector<1x128xf32>
    %355 = arith.maximumf %335, %354 : vector<1x128xf32>
    %356 = vector.extract_strided_slice %30 {offsets = [16, 0], sizes = [1, 128], strides = [1, 1]} : vector<32x128xf32> to vector<1x128xf32>
    %357 = vector.broadcast %356 : vector<1x128xf32> to vector<32x128xf32>
    %358 = arith.subf %30, %357 : vector<32x128xf32>
    %359 = vector.extract_strided_slice %32 {offsets = [16, 0], sizes = [1, 128], strides = [1, 1]} : vector<32x128xf32> to vector<1x128xf32>
    %360 = vector.broadcast %359 : vector<1x128xf32> to vector<32x128xf32>
    %361 = arith.subf %32, %360 : vector<32x128xf32>
    %362 = vector.extract_strided_slice %34 {offsets = [16, 0], sizes = [1, 128], strides = [1, 1]} : vector<32x128xf32> to vector<1x128xf32>
    %363 = vector.broadcast %362 : vector<1x128xf32> to vector<32x128xf32>
    %364 = arith.subf %34, %363 : vector<32x128xf32>
    %365 = arith.mulf %358, %358 : vector<32x128xf32>
    %366 = arith.mulf %361, %361 : vector<32x128xf32>
    %367 = arith.addf %365, %366 : vector<32x128xf32>
    %368 = arith.mulf %364, %364 : vector<32x128xf32>
    %369 = arith.addf %367, %368 : vector<32x128xf32>
    %370 = arith.mulf %369, %9 : vector<32x128xf32>
    %cst_24 = arith.constant dense<0xFF800000> : vector<128xf32>
    %371 = vector.multi_reduction <maximumf>, %370, %cst_24 [0] : vector<32x128xf32> to vector<128xf32>
    %372 = vector.shape_cast %371 : vector<128xf32> to vector<1x128xf32>
    %373 = vector.extract_strided_slice %9 {offsets = [16, 0], sizes = [1, 128], strides = [1, 1]} : vector<32x128xf32> to vector<1x128xf32>
    %374 = arith.mulf %372, %373 : vector<1x128xf32>
    %375 = arith.maximumf %355, %374 : vector<1x128xf32>
    %376 = vector.extract_strided_slice %30 {offsets = [17, 0], sizes = [1, 128], strides = [1, 1]} : vector<32x128xf32> to vector<1x128xf32>
    %377 = vector.broadcast %376 : vector<1x128xf32> to vector<32x128xf32>
    %378 = arith.subf %30, %377 : vector<32x128xf32>
    %379 = vector.extract_strided_slice %32 {offsets = [17, 0], sizes = [1, 128], strides = [1, 1]} : vector<32x128xf32> to vector<1x128xf32>
    %380 = vector.broadcast %379 : vector<1x128xf32> to vector<32x128xf32>
    %381 = arith.subf %32, %380 : vector<32x128xf32>
    %382 = vector.extract_strided_slice %34 {offsets = [17, 0], sizes = [1, 128], strides = [1, 1]} : vector<32x128xf32> to vector<1x128xf32>
    %383 = vector.broadcast %382 : vector<1x128xf32> to vector<32x128xf32>
    %384 = arith.subf %34, %383 : vector<32x128xf32>
    %385 = arith.mulf %378, %378 : vector<32x128xf32>
    %386 = arith.mulf %381, %381 : vector<32x128xf32>
    %387 = arith.addf %385, %386 : vector<32x128xf32>
    %388 = arith.mulf %384, %384 : vector<32x128xf32>
    %389 = arith.addf %387, %388 : vector<32x128xf32>
    %390 = arith.mulf %389, %9 : vector<32x128xf32>
    %cst_25 = arith.constant dense<0xFF800000> : vector<128xf32>
    %391 = vector.multi_reduction <maximumf>, %390, %cst_25 [0] : vector<32x128xf32> to vector<128xf32>
    %392 = vector.shape_cast %391 : vector<128xf32> to vector<1x128xf32>
    %393 = vector.extract_strided_slice %9 {offsets = [17, 0], sizes = [1, 128], strides = [1, 1]} : vector<32x128xf32> to vector<1x128xf32>
    %394 = arith.mulf %392, %393 : vector<1x128xf32>
    %395 = arith.maximumf %375, %394 : vector<1x128xf32>
    %396 = vector.extract_strided_slice %30 {offsets = [18, 0], sizes = [1, 128], strides = [1, 1]} : vector<32x128xf32> to vector<1x128xf32>
    %397 = vector.broadcast %396 : vector<1x128xf32> to vector<32x128xf32>
    %398 = arith.subf %30, %397 : vector<32x128xf32>
    %399 = vector.extract_strided_slice %32 {offsets = [18, 0], sizes = [1, 128], strides = [1, 1]} : vector<32x128xf32> to vector<1x128xf32>
    %400 = vector.broadcast %399 : vector<1x128xf32> to vector<32x128xf32>
    %401 = arith.subf %32, %400 : vector<32x128xf32>
    %402 = vector.extract_strided_slice %34 {offsets = [18, 0], sizes = [1, 128], strides = [1, 1]} : vector<32x128xf32> to vector<1x128xf32>
    %403 = vector.broadcast %402 : vector<1x128xf32> to vector<32x128xf32>
    %404 = arith.subf %34, %403 : vector<32x128xf32>
    %405 = arith.mulf %398, %398 : vector<32x128xf32>
    %406 = arith.mulf %401, %401 : vector<32x128xf32>
    %407 = arith.addf %405, %406 : vector<32x128xf32>
    %408 = arith.mulf %404, %404 : vector<32x128xf32>
    %409 = arith.addf %407, %408 : vector<32x128xf32>
    %410 = arith.mulf %409, %9 : vector<32x128xf32>
    %cst_26 = arith.constant dense<0xFF800000> : vector<128xf32>
    %411 = vector.multi_reduction <maximumf>, %410, %cst_26 [0] : vector<32x128xf32> to vector<128xf32>
    %412 = vector.shape_cast %411 : vector<128xf32> to vector<1x128xf32>
    %413 = vector.extract_strided_slice %9 {offsets = [18, 0], sizes = [1, 128], strides = [1, 1]} : vector<32x128xf32> to vector<1x128xf32>
    %414 = arith.mulf %412, %413 : vector<1x128xf32>
    %415 = arith.maximumf %395, %414 : vector<1x128xf32>
    %416 = vector.extract_strided_slice %30 {offsets = [19, 0], sizes = [1, 128], strides = [1, 1]} : vector<32x128xf32> to vector<1x128xf32>
    %417 = vector.broadcast %416 : vector<1x128xf32> to vector<32x128xf32>
    %418 = arith.subf %30, %417 : vector<32x128xf32>
    %419 = vector.extract_strided_slice %32 {offsets = [19, 0], sizes = [1, 128], strides = [1, 1]} : vector<32x128xf32> to vector<1x128xf32>
    %420 = vector.broadcast %419 : vector<1x128xf32> to vector<32x128xf32>
    %421 = arith.subf %32, %420 : vector<32x128xf32>
    %422 = vector.extract_strided_slice %34 {offsets = [19, 0], sizes = [1, 128], strides = [1, 1]} : vector<32x128xf32> to vector<1x128xf32>
    %423 = vector.broadcast %422 : vector<1x128xf32> to vector<32x128xf32>
    %424 = arith.subf %34, %423 : vector<32x128xf32>
    %425 = arith.mulf %418, %418 : vector<32x128xf32>
    %426 = arith.mulf %421, %421 : vector<32x128xf32>
    %427 = arith.addf %425, %426 : vector<32x128xf32>
    %428 = arith.mulf %424, %424 : vector<32x128xf32>
    %429 = arith.addf %427, %428 : vector<32x128xf32>
    %430 = arith.mulf %429, %9 : vector<32x128xf32>
    %cst_27 = arith.constant dense<0xFF800000> : vector<128xf32>
    %431 = vector.multi_reduction <maximumf>, %430, %cst_27 [0] : vector<32x128xf32> to vector<128xf32>
    %432 = vector.shape_cast %431 : vector<128xf32> to vector<1x128xf32>
    %433 = vector.extract_strided_slice %9 {offsets = [19, 0], sizes = [1, 128], strides = [1, 1]} : vector<32x128xf32> to vector<1x128xf32>
    %434 = arith.mulf %432, %433 : vector<1x128xf32>
    %435 = arith.maximumf %415, %434 : vector<1x128xf32>
    %436 = vector.extract_strided_slice %30 {offsets = [20, 0], sizes = [1, 128], strides = [1, 1]} : vector<32x128xf32> to vector<1x128xf32>
    %437 = vector.broadcast %436 : vector<1x128xf32> to vector<32x128xf32>
    %438 = arith.subf %30, %437 : vector<32x128xf32>
    %439 = vector.extract_strided_slice %32 {offsets = [20, 0], sizes = [1, 128], strides = [1, 1]} : vector<32x128xf32> to vector<1x128xf32>
    %440 = vector.broadcast %439 : vector<1x128xf32> to vector<32x128xf32>
    %441 = arith.subf %32, %440 : vector<32x128xf32>
    %442 = vector.extract_strided_slice %34 {offsets = [20, 0], sizes = [1, 128], strides = [1, 1]} : vector<32x128xf32> to vector<1x128xf32>
    %443 = vector.broadcast %442 : vector<1x128xf32> to vector<32x128xf32>
    %444 = arith.subf %34, %443 : vector<32x128xf32>
    %445 = arith.mulf %438, %438 : vector<32x128xf32>
    %446 = arith.mulf %441, %441 : vector<32x128xf32>
    %447 = arith.addf %445, %446 : vector<32x128xf32>
    %448 = arith.mulf %444, %444 : vector<32x128xf32>
    %449 = arith.addf %447, %448 : vector<32x128xf32>
    %450 = arith.mulf %449, %9 : vector<32x128xf32>
    %cst_28 = arith.constant dense<0xFF800000> : vector<128xf32>
    %451 = vector.multi_reduction <maximumf>, %450, %cst_28 [0] : vector<32x128xf32> to vector<128xf32>
    %452 = vector.shape_cast %451 : vector<128xf32> to vector<1x128xf32>
    %453 = vector.extract_strided_slice %9 {offsets = [20, 0], sizes = [1, 128], strides = [1, 1]} : vector<32x128xf32> to vector<1x128xf32>
    %454 = arith.mulf %452, %453 : vector<1x128xf32>
    %455 = arith.maximumf %435, %454 : vector<1x128xf32>
    %456 = vector.extract_strided_slice %30 {offsets = [21, 0], sizes = [1, 128], strides = [1, 1]} : vector<32x128xf32> to vector<1x128xf32>
    %457 = vector.broadcast %456 : vector<1x128xf32> to vector<32x128xf32>
    %458 = arith.subf %30, %457 : vector<32x128xf32>
    %459 = vector.extract_strided_slice %32 {offsets = [21, 0], sizes = [1, 128], strides = [1, 1]} : vector<32x128xf32> to vector<1x128xf32>
    %460 = vector.broadcast %459 : vector<1x128xf32> to vector<32x128xf32>
    %461 = arith.subf %32, %460 : vector<32x128xf32>
    %462 = vector.extract_strided_slice %34 {offsets = [21, 0], sizes = [1, 128], strides = [1, 1]} : vector<32x128xf32> to vector<1x128xf32>
    %463 = vector.broadcast %462 : vector<1x128xf32> to vector<32x128xf32>
    %464 = arith.subf %34, %463 : vector<32x128xf32>
    %465 = arith.mulf %458, %458 : vector<32x128xf32>
    %466 = arith.mulf %461, %461 : vector<32x128xf32>
    %467 = arith.addf %465, %466 : vector<32x128xf32>
    %468 = arith.mulf %464, %464 : vector<32x128xf32>
    %469 = arith.addf %467, %468 : vector<32x128xf32>
    %470 = arith.mulf %469, %9 : vector<32x128xf32>
    %cst_29 = arith.constant dense<0xFF800000> : vector<128xf32>
    %471 = vector.multi_reduction <maximumf>, %470, %cst_29 [0] : vector<32x128xf32> to vector<128xf32>
    %472 = vector.shape_cast %471 : vector<128xf32> to vector<1x128xf32>
    %473 = vector.extract_strided_slice %9 {offsets = [21, 0], sizes = [1, 128], strides = [1, 1]} : vector<32x128xf32> to vector<1x128xf32>
    %474 = arith.mulf %472, %473 : vector<1x128xf32>
    %475 = arith.maximumf %455, %474 : vector<1x128xf32>
    %476 = vector.extract_strided_slice %30 {offsets = [22, 0], sizes = [1, 128], strides = [1, 1]} : vector<32x128xf32> to vector<1x128xf32>
    %477 = vector.broadcast %476 : vector<1x128xf32> to vector<32x128xf32>
    %478 = arith.subf %30, %477 : vector<32x128xf32>
    %479 = vector.extract_strided_slice %32 {offsets = [22, 0], sizes = [1, 128], strides = [1, 1]} : vector<32x128xf32> to vector<1x128xf32>
    %480 = vector.broadcast %479 : vector<1x128xf32> to vector<32x128xf32>
    %481 = arith.subf %32, %480 : vector<32x128xf32>
    %482 = vector.extract_strided_slice %34 {offsets = [22, 0], sizes = [1, 128], strides = [1, 1]} : vector<32x128xf32> to vector<1x128xf32>
    %483 = vector.broadcast %482 : vector<1x128xf32> to vector<32x128xf32>
    %484 = arith.subf %34, %483 : vector<32x128xf32>
    %485 = arith.mulf %478, %478 : vector<32x128xf32>
    %486 = arith.mulf %481, %481 : vector<32x128xf32>
    %487 = arith.addf %485, %486 : vector<32x128xf32>
    %488 = arith.mulf %484, %484 : vector<32x128xf32>
    %489 = arith.addf %487, %488 : vector<32x128xf32>
    %490 = arith.mulf %489, %9 : vector<32x128xf32>
    %cst_30 = arith.constant dense<0xFF800000> : vector<128xf32>
    %491 = vector.multi_reduction <maximumf>, %490, %cst_30 [0] : vector<32x128xf32> to vector<128xf32>
    %492 = vector.shape_cast %491 : vector<128xf32> to vector<1x128xf32>
    %493 = vector.extract_strided_slice %9 {offsets = [22, 0], sizes = [1, 128], strides = [1, 1]} : vector<32x128xf32> to vector<1x128xf32>
    %494 = arith.mulf %492, %493 : vector<1x128xf32>
    %495 = arith.maximumf %475, %494 : vector<1x128xf32>
    %496 = vector.extract_strided_slice %30 {offsets = [23, 0], sizes = [1, 128], strides = [1, 1]} : vector<32x128xf32> to vector<1x128xf32>
    %497 = vector.broadcast %496 : vector<1x128xf32> to vector<32x128xf32>
    %498 = arith.subf %30, %497 : vector<32x128xf32>
    %499 = vector.extract_strided_slice %32 {offsets = [23, 0], sizes = [1, 128], strides = [1, 1]} : vector<32x128xf32> to vector<1x128xf32>
    %500 = vector.broadcast %499 : vector<1x128xf32> to vector<32x128xf32>
    %501 = arith.subf %32, %500 : vector<32x128xf32>
    %502 = vector.extract_strided_slice %34 {offsets = [23, 0], sizes = [1, 128], strides = [1, 1]} : vector<32x128xf32> to vector<1x128xf32>
    %503 = vector.broadcast %502 : vector<1x128xf32> to vector<32x128xf32>
    %504 = arith.subf %34, %503 : vector<32x128xf32>
    %505 = arith.mulf %498, %498 : vector<32x128xf32>
    %506 = arith.mulf %501, %501 : vector<32x128xf32>
    %507 = arith.addf %505, %506 : vector<32x128xf32>
    %508 = arith.mulf %504, %504 : vector<32x128xf32>
    %509 = arith.addf %507, %508 : vector<32x128xf32>
    %510 = arith.mulf %509, %9 : vector<32x128xf32>
    %cst_31 = arith.constant dense<0xFF800000> : vector<128xf32>
    %511 = vector.multi_reduction <maximumf>, %510, %cst_31 [0] : vector<32x128xf32> to vector<128xf32>
    %512 = vector.shape_cast %511 : vector<128xf32> to vector<1x128xf32>
    %513 = vector.extract_strided_slice %9 {offsets = [23, 0], sizes = [1, 128], strides = [1, 1]} : vector<32x128xf32> to vector<1x128xf32>
    %514 = arith.mulf %512, %513 : vector<1x128xf32>
    %515 = arith.maximumf %495, %514 : vector<1x128xf32>
    %516 = vector.extract_strided_slice %30 {offsets = [24, 0], sizes = [1, 128], strides = [1, 1]} : vector<32x128xf32> to vector<1x128xf32>
    %517 = vector.broadcast %516 : vector<1x128xf32> to vector<32x128xf32>
    %518 = arith.subf %30, %517 : vector<32x128xf32>
    %519 = vector.extract_strided_slice %32 {offsets = [24, 0], sizes = [1, 128], strides = [1, 1]} : vector<32x128xf32> to vector<1x128xf32>
    %520 = vector.broadcast %519 : vector<1x128xf32> to vector<32x128xf32>
    %521 = arith.subf %32, %520 : vector<32x128xf32>
    %522 = vector.extract_strided_slice %34 {offsets = [24, 0], sizes = [1, 128], strides = [1, 1]} : vector<32x128xf32> to vector<1x128xf32>
    %523 = vector.broadcast %522 : vector<1x128xf32> to vector<32x128xf32>
    %524 = arith.subf %34, %523 : vector<32x128xf32>
    %525 = arith.mulf %518, %518 : vector<32x128xf32>
    %526 = arith.mulf %521, %521 : vector<32x128xf32>
    %527 = arith.addf %525, %526 : vector<32x128xf32>
    %528 = arith.mulf %524, %524 : vector<32x128xf32>
    %529 = arith.addf %527, %528 : vector<32x128xf32>
    %530 = arith.mulf %529, %9 : vector<32x128xf32>
    %cst_32 = arith.constant dense<0xFF800000> : vector<128xf32>
    %531 = vector.multi_reduction <maximumf>, %530, %cst_32 [0] : vector<32x128xf32> to vector<128xf32>
    %532 = vector.shape_cast %531 : vector<128xf32> to vector<1x128xf32>
    %533 = vector.extract_strided_slice %9 {offsets = [24, 0], sizes = [1, 128], strides = [1, 1]} : vector<32x128xf32> to vector<1x128xf32>
    %534 = arith.mulf %532, %533 : vector<1x128xf32>
    %535 = arith.maximumf %515, %534 : vector<1x128xf32>
    %536 = vector.extract_strided_slice %30 {offsets = [25, 0], sizes = [1, 128], strides = [1, 1]} : vector<32x128xf32> to vector<1x128xf32>
    %537 = vector.broadcast %536 : vector<1x128xf32> to vector<32x128xf32>
    %538 = arith.subf %30, %537 : vector<32x128xf32>
    %539 = vector.extract_strided_slice %32 {offsets = [25, 0], sizes = [1, 128], strides = [1, 1]} : vector<32x128xf32> to vector<1x128xf32>
    %540 = vector.broadcast %539 : vector<1x128xf32> to vector<32x128xf32>
    %541 = arith.subf %32, %540 : vector<32x128xf32>
    %542 = vector.extract_strided_slice %34 {offsets = [25, 0], sizes = [1, 128], strides = [1, 1]} : vector<32x128xf32> to vector<1x128xf32>
    %543 = vector.broadcast %542 : vector<1x128xf32> to vector<32x128xf32>
    %544 = arith.subf %34, %543 : vector<32x128xf32>
    %545 = arith.mulf %538, %538 : vector<32x128xf32>
    %546 = arith.mulf %541, %541 : vector<32x128xf32>
    %547 = arith.addf %545, %546 : vector<32x128xf32>
    %548 = arith.mulf %544, %544 : vector<32x128xf32>
    %549 = arith.addf %547, %548 : vector<32x128xf32>
    %550 = arith.mulf %549, %9 : vector<32x128xf32>
    %cst_33 = arith.constant dense<0xFF800000> : vector<128xf32>
    %551 = vector.multi_reduction <maximumf>, %550, %cst_33 [0] : vector<32x128xf32> to vector<128xf32>
    %552 = vector.shape_cast %551 : vector<128xf32> to vector<1x128xf32>
    %553 = vector.extract_strided_slice %9 {offsets = [25, 0], sizes = [1, 128], strides = [1, 1]} : vector<32x128xf32> to vector<1x128xf32>
    %554 = arith.mulf %552, %553 : vector<1x128xf32>
    %555 = arith.maximumf %535, %554 : vector<1x128xf32>
    %556 = vector.extract_strided_slice %30 {offsets = [26, 0], sizes = [1, 128], strides = [1, 1]} : vector<32x128xf32> to vector<1x128xf32>
    %557 = vector.broadcast %556 : vector<1x128xf32> to vector<32x128xf32>
    %558 = arith.subf %30, %557 : vector<32x128xf32>
    %559 = vector.extract_strided_slice %32 {offsets = [26, 0], sizes = [1, 128], strides = [1, 1]} : vector<32x128xf32> to vector<1x128xf32>
    %560 = vector.broadcast %559 : vector<1x128xf32> to vector<32x128xf32>
    %561 = arith.subf %32, %560 : vector<32x128xf32>
    %562 = vector.extract_strided_slice %34 {offsets = [26, 0], sizes = [1, 128], strides = [1, 1]} : vector<32x128xf32> to vector<1x128xf32>
    %563 = vector.broadcast %562 : vector<1x128xf32> to vector<32x128xf32>
    %564 = arith.subf %34, %563 : vector<32x128xf32>
    %565 = arith.mulf %558, %558 : vector<32x128xf32>
    %566 = arith.mulf %561, %561 : vector<32x128xf32>
    %567 = arith.addf %565, %566 : vector<32x128xf32>
    %568 = arith.mulf %564, %564 : vector<32x128xf32>
    %569 = arith.addf %567, %568 : vector<32x128xf32>
    %570 = arith.mulf %569, %9 : vector<32x128xf32>
    %cst_34 = arith.constant dense<0xFF800000> : vector<128xf32>
    %571 = vector.multi_reduction <maximumf>, %570, %cst_34 [0] : vector<32x128xf32> to vector<128xf32>
    %572 = vector.shape_cast %571 : vector<128xf32> to vector<1x128xf32>
    %573 = vector.extract_strided_slice %9 {offsets = [26, 0], sizes = [1, 128], strides = [1, 1]} : vector<32x128xf32> to vector<1x128xf32>
    %574 = arith.mulf %572, %573 : vector<1x128xf32>
    %575 = arith.maximumf %555, %574 : vector<1x128xf32>
    %576 = vector.extract_strided_slice %30 {offsets = [27, 0], sizes = [1, 128], strides = [1, 1]} : vector<32x128xf32> to vector<1x128xf32>
    %577 = vector.broadcast %576 : vector<1x128xf32> to vector<32x128xf32>
    %578 = arith.subf %30, %577 : vector<32x128xf32>
    %579 = vector.extract_strided_slice %32 {offsets = [27, 0], sizes = [1, 128], strides = [1, 1]} : vector<32x128xf32> to vector<1x128xf32>
    %580 = vector.broadcast %579 : vector<1x128xf32> to vector<32x128xf32>
    %581 = arith.subf %32, %580 : vector<32x128xf32>
    %582 = vector.extract_strided_slice %34 {offsets = [27, 0], sizes = [1, 128], strides = [1, 1]} : vector<32x128xf32> to vector<1x128xf32>
    %583 = vector.broadcast %582 : vector<1x128xf32> to vector<32x128xf32>
    %584 = arith.subf %34, %583 : vector<32x128xf32>
    %585 = arith.mulf %578, %578 : vector<32x128xf32>
    %586 = arith.mulf %581, %581 : vector<32x128xf32>
    %587 = arith.addf %585, %586 : vector<32x128xf32>
    %588 = arith.mulf %584, %584 : vector<32x128xf32>
    %589 = arith.addf %587, %588 : vector<32x128xf32>
    %590 = arith.mulf %589, %9 : vector<32x128xf32>
    %cst_35 = arith.constant dense<0xFF800000> : vector<128xf32>
    %591 = vector.multi_reduction <maximumf>, %590, %cst_35 [0] : vector<32x128xf32> to vector<128xf32>
    %592 = vector.shape_cast %591 : vector<128xf32> to vector<1x128xf32>
    %593 = vector.extract_strided_slice %9 {offsets = [27, 0], sizes = [1, 128], strides = [1, 1]} : vector<32x128xf32> to vector<1x128xf32>
    %594 = arith.mulf %592, %593 : vector<1x128xf32>
    %595 = arith.maximumf %575, %594 : vector<1x128xf32>
    %596 = vector.extract_strided_slice %30 {offsets = [28, 0], sizes = [1, 128], strides = [1, 1]} : vector<32x128xf32> to vector<1x128xf32>
    %597 = vector.broadcast %596 : vector<1x128xf32> to vector<32x128xf32>
    %598 = arith.subf %30, %597 : vector<32x128xf32>
    %599 = vector.extract_strided_slice %32 {offsets = [28, 0], sizes = [1, 128], strides = [1, 1]} : vector<32x128xf32> to vector<1x128xf32>
    %600 = vector.broadcast %599 : vector<1x128xf32> to vector<32x128xf32>
    %601 = arith.subf %32, %600 : vector<32x128xf32>
    %602 = vector.extract_strided_slice %34 {offsets = [28, 0], sizes = [1, 128], strides = [1, 1]} : vector<32x128xf32> to vector<1x128xf32>
    %603 = vector.broadcast %602 : vector<1x128xf32> to vector<32x128xf32>
    %604 = arith.subf %34, %603 : vector<32x128xf32>
    %605 = arith.mulf %598, %598 : vector<32x128xf32>
    %606 = arith.mulf %601, %601 : vector<32x128xf32>
    %607 = arith.addf %605, %606 : vector<32x128xf32>
    %608 = arith.mulf %604, %604 : vector<32x128xf32>
    %609 = arith.addf %607, %608 : vector<32x128xf32>
    %610 = arith.mulf %609, %9 : vector<32x128xf32>
    %cst_36 = arith.constant dense<0xFF800000> : vector<128xf32>
    %611 = vector.multi_reduction <maximumf>, %610, %cst_36 [0] : vector<32x128xf32> to vector<128xf32>
    %612 = vector.shape_cast %611 : vector<128xf32> to vector<1x128xf32>
    %613 = vector.extract_strided_slice %9 {offsets = [28, 0], sizes = [1, 128], strides = [1, 1]} : vector<32x128xf32> to vector<1x128xf32>
    %614 = arith.mulf %612, %613 : vector<1x128xf32>
    %615 = arith.maximumf %595, %614 : vector<1x128xf32>
    %616 = vector.extract_strided_slice %30 {offsets = [29, 0], sizes = [1, 128], strides = [1, 1]} : vector<32x128xf32> to vector<1x128xf32>
    %617 = vector.broadcast %616 : vector<1x128xf32> to vector<32x128xf32>
    %618 = arith.subf %30, %617 : vector<32x128xf32>
    %619 = vector.extract_strided_slice %32 {offsets = [29, 0], sizes = [1, 128], strides = [1, 1]} : vector<32x128xf32> to vector<1x128xf32>
    %620 = vector.broadcast %619 : vector<1x128xf32> to vector<32x128xf32>
    %621 = arith.subf %32, %620 : vector<32x128xf32>
    %622 = vector.extract_strided_slice %34 {offsets = [29, 0], sizes = [1, 128], strides = [1, 1]} : vector<32x128xf32> to vector<1x128xf32>
    %623 = vector.broadcast %622 : vector<1x128xf32> to vector<32x128xf32>
    %624 = arith.subf %34, %623 : vector<32x128xf32>
    %625 = arith.mulf %618, %618 : vector<32x128xf32>
    %626 = arith.mulf %621, %621 : vector<32x128xf32>
    %627 = arith.addf %625, %626 : vector<32x128xf32>
    %628 = arith.mulf %624, %624 : vector<32x128xf32>
    %629 = arith.addf %627, %628 : vector<32x128xf32>
    %630 = arith.mulf %629, %9 : vector<32x128xf32>
    %cst_37 = arith.constant dense<0xFF800000> : vector<128xf32>
    %631 = vector.multi_reduction <maximumf>, %630, %cst_37 [0] : vector<32x128xf32> to vector<128xf32>
    %632 = vector.shape_cast %631 : vector<128xf32> to vector<1x128xf32>
    %633 = vector.extract_strided_slice %9 {offsets = [29, 0], sizes = [1, 128], strides = [1, 1]} : vector<32x128xf32> to vector<1x128xf32>
    %634 = arith.mulf %632, %633 : vector<1x128xf32>
    %635 = arith.maximumf %615, %634 : vector<1x128xf32>
    %636 = vector.extract_strided_slice %30 {offsets = [30, 0], sizes = [1, 128], strides = [1, 1]} : vector<32x128xf32> to vector<1x128xf32>
    %637 = vector.broadcast %636 : vector<1x128xf32> to vector<32x128xf32>
    %638 = arith.subf %30, %637 : vector<32x128xf32>
    %639 = vector.extract_strided_slice %32 {offsets = [30, 0], sizes = [1, 128], strides = [1, 1]} : vector<32x128xf32> to vector<1x128xf32>
    %640 = vector.broadcast %639 : vector<1x128xf32> to vector<32x128xf32>
    %641 = arith.subf %32, %640 : vector<32x128xf32>
    %642 = vector.extract_strided_slice %34 {offsets = [30, 0], sizes = [1, 128], strides = [1, 1]} : vector<32x128xf32> to vector<1x128xf32>
    %643 = vector.broadcast %642 : vector<1x128xf32> to vector<32x128xf32>
    %644 = arith.subf %34, %643 : vector<32x128xf32>
    %645 = arith.mulf %638, %638 : vector<32x128xf32>
    %646 = arith.mulf %641, %641 : vector<32x128xf32>
    %647 = arith.addf %645, %646 : vector<32x128xf32>
    %648 = arith.mulf %644, %644 : vector<32x128xf32>
    %649 = arith.addf %647, %648 : vector<32x128xf32>
    %650 = arith.mulf %649, %9 : vector<32x128xf32>
    %cst_38 = arith.constant dense<0xFF800000> : vector<128xf32>
    %651 = vector.multi_reduction <maximumf>, %650, %cst_38 [0] : vector<32x128xf32> to vector<128xf32>
    %652 = vector.shape_cast %651 : vector<128xf32> to vector<1x128xf32>
    %653 = vector.extract_strided_slice %9 {offsets = [30, 0], sizes = [1, 128], strides = [1, 1]} : vector<32x128xf32> to vector<1x128xf32>
    %654 = arith.mulf %652, %653 : vector<1x128xf32>
    %655 = arith.maximumf %635, %654 : vector<1x128xf32>
    %656 = vector.extract_strided_slice %30 {offsets = [31, 0], sizes = [1, 128], strides = [1, 1]} : vector<32x128xf32> to vector<1x128xf32>
    %657 = vector.broadcast %656 : vector<1x128xf32> to vector<32x128xf32>
    %658 = arith.subf %30, %657 : vector<32x128xf32>
    %659 = vector.extract_strided_slice %32 {offsets = [31, 0], sizes = [1, 128], strides = [1, 1]} : vector<32x128xf32> to vector<1x128xf32>
    %660 = vector.broadcast %659 : vector<1x128xf32> to vector<32x128xf32>
    %661 = arith.subf %32, %660 : vector<32x128xf32>
    %662 = vector.extract_strided_slice %34 {offsets = [31, 0], sizes = [1, 128], strides = [1, 1]} : vector<32x128xf32> to vector<1x128xf32>
    %663 = vector.broadcast %662 : vector<1x128xf32> to vector<32x128xf32>
    %664 = arith.subf %34, %663 : vector<32x128xf32>
    %665 = arith.mulf %658, %658 : vector<32x128xf32>
    %666 = arith.mulf %661, %661 : vector<32x128xf32>
    %667 = arith.addf %665, %666 : vector<32x128xf32>
    %668 = arith.mulf %664, %664 : vector<32x128xf32>
    %669 = arith.addf %667, %668 : vector<32x128xf32>
    %670 = arith.mulf %669, %9 : vector<32x128xf32>
    %cst_39 = arith.constant dense<0xFF800000> : vector<128xf32>
    %671 = vector.multi_reduction <maximumf>, %670, %cst_39 [0] : vector<32x128xf32> to vector<128xf32>
    %672 = vector.shape_cast %671 : vector<128xf32> to vector<1x128xf32>
    %673 = vector.extract_strided_slice %9 {offsets = [31, 0], sizes = [1, 128], strides = [1, 1]} : vector<32x128xf32> to vector<1x128xf32>
    %674 = arith.mulf %672, %673 : vector<1x128xf32>
    %675 = arith.maximumf %655, %674 : vector<1x128xf32>
    %676 = math.sqrt %675 : vector<1x128xf32>
    %c1_i32 = arith.constant 1 : i32
    %677 = vector.broadcast %c1_i32 : i32 to vector<1x128xi32>
    %678 = arith.cmpi eq, %1, %677 : vector<1x128xi32>
    %cst_40 = arith.constant 0.000000e+00 : f32
    %cst_41 = arith.constant 1.000000e+00 : f32
    %679 = vector.broadcast %cst_40 : f32 to vector<1x128xf32>
    %680 = vector.broadcast %cst_41 : f32 to vector<1x128xf32>
    %681 = arith.select %678, %679, %680 : vector<1x128xi1>, vector<1x128xf32>
    %682 = vector.extract_strided_slice %24 {offsets = [0, 0], sizes = [1, 128], strides = [1, 1]} : vector<3x128xf32> to vector<1x128xf32>
    %c0_42 = arith.constant 0 : index
    %c0_43 = arith.constant 0 : index
    %683 = vector.load %arg3[%c0_42, %c0_43] : memref<7x128xf32, #tpu.memory_space<vmem>>, vector<1x128xf32>
    tpu.vector_store %arg3[%c0_42, %c0_43], %682 {strides = array<i32>} : memref<7x128xf32, #tpu.memory_space<vmem>>, vector<1x128xf32>,
    %684 = vector.extract_strided_slice %24 {offsets = [1, 0], sizes = [2, 128], strides = [1, 1]} : vector<3x128xf32> to vector<2x128xf32>
    %685 = vector.broadcast %681 : vector<1x128xf32> to vector<2x128xf32>
    %686 = arith.mulf %684, %685 : vector<2x128xf32>
    %c1 = arith.constant 1 : index
    %c0_44 = arith.constant 0 : index
    %687 = vector.load %arg3[%c1, %c0_44] : memref<7x128xf32, #tpu.memory_space<vmem>>, vector<2x128xf32>
    tpu.vector_store %arg3[%c1, %c0_44], %686 {strides = array<i32>} : memref<7x128xf32, #tpu.memory_space<vmem>>, vector<2x128xf32>,
    %688 = vector.broadcast %681 : vector<1x128xf32> to vector<3x128xf32>
    %689 = arith.mulf %28, %688 : vector<3x128xf32>
    %c3 = arith.constant 3 : index
    %c0_45 = arith.constant 0 : index
    %690 = vector.load %arg3[%c3, %c0_45] : memref<7x128xf32, #tpu.memory_space<vmem>>, vector<3x128xf32>
    tpu.vector_store %arg3[%c3, %c0_45], %689 {strides = array<i32>} : memref<7x128xf32, #tpu.memory_space<vmem>>, vector<3x128xf32>,
    %691 = arith.mulf %676, %681 : vector<1x128xf32>
    %c6 = arith.constant 6 : index
    %c0_46 = arith.constant 0 : index
    %692 = vector.load %arg3[%c6, %c0_46] : memref<7x128xf32, #tpu.memory_space<vmem>>, vector<1x128xf32>
    tpu.vector_store %arg3[%c6, %c0_46], %691 {strides = array<i32>} : memref<7x128xf32, #tpu.memory_space<vmem>>, vector<1x128xf32>,
    return
  }
  func.func @transform_0(%arg0: i32) -> (i32, i32, i32) {
    %c0_i32 = arith.constant 0 : i32
    %c0_i32_0 = arith.constant 0 : i32
    %c0_i32_1 = arith.constant 0 : i32
    return %c0_i32, %c0_i32_0, %arg0 : i32, i32, i32
  }
  func.func @transform_1(%arg0: i32) -> (i32, i32) {
    %c0_i32 = arith.constant 0 : i32
    %c0_i32_0 = arith.constant 0 : i32
    return %c0_i32, %arg0 : i32, i32
  }
  func.func @transform_2(%arg0: i32) -> (i32, i32) {
    %c0_i32 = arith.constant 0 : i32
    %c0_i32_0 = arith.constant 0 : i32
    return %c0_i32, %arg0 : i32, i32
  }
}

</mosaic_0001>

<llo_original>
// kernel: tpu_custom_call.1
$region0: #{tpu_custom_call.1}
  #allocation0 [shape = 'u32[]', space=smem, size = 0x4, offset = 0x4, fixed_abs, tag = 'smem constant byte address 0x4 - core index']
  #allocation1 [shape = 'u32[144,128]{1,0:T(1,128)}', space=vmem, size = 0x12000, scoped, tag = 'internal scratch']
  %s0 = inlined_call_operand.hbm [shape: f32[3,32,128], index: 0, kind: input, shape index: {}]
  %s1 = inlined_call_operand.vmem [shape: s32[1,128], index: 1, kind: input, shape index: {}]
  %s2 = inlined_call_operand.hbm [shape: f32[7,128], index: 2, kind: output, shape index: {}]
  %s3 = sld [smem:[#allocation0]]
  $region22: #{tpu_custom_call.1} parent=0
    _
  %s5 = ssub.s32 1, %s3
  %s6 = scalar_select 0, %s5, %s3
  $region1: #{tpu_custom_call.1} parent=0
    #allocation2 [shape = 'u8[49152]{0}', space=vmem, size = 0xc000, scoped, tag = 'input window, operand 0, single buffered']
    #allocation3 [shape = 's32[1]{0}', space=sflag, size = 0x4, scoped, tag = 'scoped memory for tpu_custom_call.1']
    #allocation4 [shape = 's32[1]{0}', space=sflag, size = 0x4, scoped, tag = 'scoped memory for tpu_custom_call.1']
    #allocation5 [shape = 'u8[4096]{0}', space=vmem, size = 0x1000, scoped, tag = 'output window, operand 0, single buffered']
    %7 = vsyncpa [#allocation3], 0
    %8 = vsyncpa [#allocation4], 0
    // Predicated region
    $region2: #{tpu_custom_call.1} parent=1 // pred_check
      _
    $region3: #{tpu_custom_call.1} parent=1 // pred_check_branch
      %10 = sbr.rel (0) target = $region5
    $region4: #{tpu_custom_call.1} parent=1 // pred_region
      %s12 = ssub.s32 1536, 1536
      %13 = vsyncadd [#allocation3], %s12
      %s14 = sshll.u32 [#allocation2], 4
      %s15 = int_to_ptr.vmem [resolvable:$true] %s14
      %20 = dma.hbm_to_vmem [thread:$0]  %s0, 1536, %s15, [#allocation3], 128, 128, 8
    $region5: #{tpu_custom_call.1} parent=1 // pred_fallthru
      _
    // Predicated region
    $region6: #{tpu_custom_call.1} parent=1 // pred_check
      _
    $region7: #{tpu_custom_call.1} parent=1 // pred_check_branch
      %22 = sbr.rel (0) target = $region9
    $region8: #{tpu_custom_call.1} parent=1 // pred_region
      _
    $region9: #{tpu_custom_call.1} parent=1 // pred_fallthru
      _
    // Predicated region
    $region10: #{tpu_custom_call.1} parent=1 // pred_check
      _
    $region11: #{tpu_custom_call.1} parent=1 // pred_check_branch
      %24 = sbr.rel (0) target = $region13
    $region12: #{tpu_custom_call.1} parent=1 // pred_region
      %25 = dma.done [#allocation3], 1536
    $region13: #{tpu_custom_call.1} parent=1 // pred_fallthru
      _
    %v26 = vld [vmem:[#allocation2] sm:$0xff]
    %v27 = vld [vmem:[#allocation2 + $0x8] sm:$0xff]
    %v28 = vld [vmem:[#allocation2 + $0x10] sm:$0xff]
    %v29 = vld [vmem:[#allocation2 + $0x18] sm:$0xff]
    %v30 = vld [vmem:[#allocation2 + $0x20] sm:$0xff]
    %v31 = vld [vmem:[#allocation2 + $0x28] sm:$0xff]
    %v32 = vld [vmem:[#allocation2 + $0x30] sm:$0xff]
    %v33 = vld [vmem:[#allocation2 + $0x38] sm:$0xff]
    %v34 = vld [vmem:[#allocation2 + $0x40] sm:$0xff]
    %v35 = vld [vmem:[#allocation2 + $0x48] sm:$0xff]
    %v36 = vld [vmem:[#allocation2 + $0x50] sm:$0xff]
    %v37 = vld [vmem:[#allocation2 + $0x58] sm:$0xff]
    %v38 = vld [vmem:[%s1] sm:$0x1]
    %v39 = vcvt.s32.f32 %v38
    %v40 = vrcp.pop %v39
    %v41 = vmul.f32 1.0, %v40
    %v42 = vlaneseq
    %v43 = vshrl.u32 %v42, 7
    %v44 = vadd.s32 %v43, 8
    %v45 = vadd.s32 %v43, 16
    %v46 = vadd.s32 %v43, 24
    %v47 = vlaneseq
    %v48 = vshrl.u32 %v47, 7
    %v49 = vsub.s32 0, %v48
    %v50 = vrot.slane %v38, %v49
    %vm51 = vcmp.lt.s32.totalorder %v43, %v50
    %vm52 = vcmp.lt.s32.totalorder %v44, %v50
    %vm53 = vcmp.lt.s32.totalorder %v45, %v50
    %vm54 = vcmp.lt.s32.totalorder %v46, %v50
    %v55 = vsel %vm51, 1, 0
    %v56 = vsel %vm52, 1, 0
    %v57 = vsel %vm53, 1, 0
    %v58 = vsel %vm54, 1, 0
    %v59 = vcvt.s32.f32 %v55
    %v60 = vcvt.s32.f32 %v56
    %v61 = vcvt.s32.f32 %v57
    %v62 = vcvt.s32.f32 %v58
    %v63 = vmul.f32 %v26, %v59
    %v64 = vmul.f32 %v27, %v60
    %v65 = vmul.f32 %v28, %v61
    %v66 = vmul.f32 %v29, %v62
    %v67 = vmul.f32 %v30, %v59
    %v68 = vmul.f32 %v31, %v60
    %v69 = vmul.f32 %v32, %v61
    %v70 = vmul.f32 %v33, %v62
    %v71 = vmul.f32 %v34, %v59
    %v72 = vmul.f32 %v35, %v60
    %v73 = vmul.f32 %v36, %v61
    %v74 = vmul.f32 %v37, %v62
    %v75 = vadd.f32 %v63, %v64
    %v76 = vadd.f32 %v75, %v65
    %v77 = vadd.f32 %v76, %v66
    %v78 = vrot.slane %v77, 4
    %v79 = vadd.f32 %v77, %v78
    %v80 = vrot.slane %v79, 2
    %v81 = vadd.f32 %v79, %v80
    %v82 = vrot.slane %v81, 1
    %v83 = vadd.f32 %v81, %v82
    %v84 = vadd.f32 %v67, %v68
    %v85 = vadd.f32 %v84, %v69
    %v86 = vadd.f32 %v85, %v70
    %v87 = vrot.slane %v86, 4
    %v88 = vadd.f32 %v86, %v87
    %v89 = vrot.slane %v88, 2
    %v90 = vadd.f32 %v88, %v89
    %v91 = vrot.slane %v90, 1
    %v92 = vadd.f32 %v90, %v91
    %v93 = vadd.f32 %v71, %v72
    %v94 = vadd.f32 %v93, %v73
    %v95 = vadd.f32 %v94, %v74
    %v96 = vrot.slane %v95, 4
    %v97 = vadd.f32 %v95, %v96
    %v98 = vrot.slane %v97, 2
    %v99 = vadd.f32 %v97, %v98
    %v100 = vrot.slane %v99, 1
    %v101 = vadd.f32 %v99, %v100
    %v103 = vlaneseq
    %v104 = vshrl.u32 %v103, 7
    %v105 = vsub.s32 0, %v104
    %v106 = vrot.slane %v41, %v105
    %v108 = vmul.f32 %v83, %v106
    %v109 = vmul.f32 %v92, %v106
    %v110 = vmul.f32 %v101, %v106
    %v111 = vlaneseq
    %v112 = vshrl.u32 %v111, 7
    %v113 = vsub.s32 0, %v112
    %v114 = vrot.slane %v108, %v113
    %v115 = vlaneseq
    %v116 = vshrl.u32 %v115, 7
    %v117 = vsub.s32 0, %v116
    %v118 = vrot.slane %v109, %v117
    %v119 = vlaneseq
    %v120 = vshrl.u32 %v119, 7
    %v121 = vsub.s32 0, %v120
    %v122 = vrot.slane %v110, %v121
    %v123 = vsub.f32 %v63, %v114
    %v124 = vsub.f32 %v64, %v114
    %v125 = vsub.f32 %v65, %v114
    %v126 = vsub.f32 %v66, %v114
    %v127 = vsub.f32 %v67, %v118
    %v128 = vsub.f32 %v68, %v118
    %v129 = vsub.f32 %v69, %v118
    %v130 = vsub.f32 %v70, %v118
    %v131 = vsub.f32 %v71, %v122
    %v132 = vsub.f32 %v72, %v122
    %v133 = vsub.f32 %v73, %v122
    %v134 = vsub.f32 %v74, %v122
    %v135 = vmul.f32 %v123, %v59
    %v136 = vmul.f32 %v124, %v60
    %v137 = vmul.f32 %v125, %v61
    %v138 = vmul.f32 %v126, %v62
    %v139 = vmul.f32 %v127, %v59
    %v140 = vmul.f32 %v128, %v60
    %v141 = vmul.f32 %v129, %v61
    %v142 = vmul.f32 %v130, %v62
    %v143 = vmul.f32 %v131, %v59
    %v144 = vmul.f32 %v132, %v60
    %v145 = vmul.f32 %v133, %v61
    %v146 = vmul.f32 %v134, %v62
    %v147 = vadd.f32 %v135, %v136
    %v148 = vadd.f32 %v147, %v137
    %v149 = vadd.f32 %v148, %v138
    %v150 = vrot.slane %v149, 4
    %v151 = vadd.f32 %v149, %v150
    %v152 = vrot.slane %v151, 2
    %v153 = vadd.f32 %v151, %v152
    %v154 = vrot.slane %v153, 1
    %v155 = vadd.f32 %v153, %v154
    %v156 = vadd.f32 %v139, %v140
    %v157 = vadd.f32 %v156, %v141
    %v158 = vadd.f32 %v157, %v142
    %v159 = vrot.slane %v158, 4
    %v160 = vadd.f32 %v158, %v159
    %v161 = vrot.slane %v160, 2
    %v162 = vadd.f32 %v160, %v161
    %v163 = vrot.slane %v162, 1
    %v164 = vadd.f32 %v162, %v163
    %v165 = vadd.f32 %v143, %v144
    %v166 = vadd.f32 %v165, %v145
    %v167 = vadd.f32 %v166, %v146
    %v168 = vrot.slane %v167, 4
    %v169 = vadd.f32 %v167, %v168
    %v170 = vrot.slane %v169, 2
    %v171 = vadd.f32 %v169, %v170
    %v172 = vrot.slane %v171, 1
    %v173 = vadd.f32 %v171, %v172
    %v174 = vmul.f32 %v155, %v106
    %v175 = vmul.f32 %v164, %v106
    %v176 = vmul.f32 %v173, %v106
    %v177 = vmul.f32 %v135, %v135
    %v178 = vmul.f32 %v136, %v136
    %v179 = vmul.f32 %v137, %v137
    %v180 = vmul.f32 %v138, %v138
    %v181 = vmul.f32 %v139, %v139
    %v182 = vmul.f32 %v140, %v140
    %v183 = vmul.f32 %v141, %v141
    %v184 = vmul.f32 %v142, %v142
    %v185 = vmul.f32 %v143, %v143
    %v186 = vmul.f32 %v144, %v144
    %v187 = vmul.f32 %v145, %v145
    %v188 = vmul.f32 %v146, %v146
    %v189 = vadd.f32 %v177, %v178
    %v190 = vadd.f32 %v189, %v179
    %v191 = vadd.f32 %v190, %v180
    %v192 = vrot.slane %v191, 4
    %v193 = vadd.f32 %v191, %v192
    %v194 = vrot.slane %v193, 2
    %v195 = vadd.f32 %v193, %v194
    %v196 = vrot.slane %v195, 1
    %v197 = vadd.f32 %v195, %v196
    %v198 = vadd.f32 %v181, %v182
    %v199 = vadd.f32 %v198, %v183
    %v200 = vadd.f32 %v199, %v184
    %v201 = vrot.slane %v200, 4
    %v202 = vadd.f32 %v200, %v201
    %v203 = vrot.slane %v202, 2
    %v204 = vadd.f32 %v202, %v203
    %v205 = vrot.slane %v204, 1
    %v206 = vadd.f32 %v204, %v205
    %v207 = vadd.f32 %v185, %v186
    %v208 = vadd.f32 %v207, %v187
    %v209 = vadd.f32 %v208, %v188
    %v210 = vrot.slane %v209, 4
    %v211 = vadd.f32 %v209, %v210
    %v212 = vrot.slane %v211, 2
    %v213 = vadd.f32 %v211, %v212
    %v214 = vrot.slane %v213, 1
    %v215 = vadd.f32 %v213, %v214
    %v216 = vmul.f32 %v197, %v106
    %v217 = vmul.f32 %v206, %v106
    %v218 = vmul.f32 %v215, %v106
    %v219 = vlaneseq
    %v220 = vshrl.u32 %v219, 7
    %v221 = vsub.s32 0, %v220
    %v222 = vrot.slane %v63, %v221
    %v223 = vsub.f32 %v63, %v222
    %v224 = vsub.f32 %v64, %v222
    %v225 = vsub.f32 %v65, %v222
    %v226 = vsub.f32 %v66, %v222
    %v227 = vlaneseq
    %v228 = vshrl.u32 %v227, 7
    %v229 = vsub.s32 0, %v228
    %v230 = vrot.slane %v67, %v229
    %v231 = vsub.f32 %v67, %v230
    %v232 = vsub.f32 %v68, %v230
    %v233 = vsub.f32 %v69, %v230
    %v234 = vsub.f32 %v70, %v230
    %v235 = vlaneseq
    %v236 = vshrl.u32 %v235, 7
    %v237 = vsub.s32 0, %v236
    %v238 = vrot.slane %v71, %v237
    %v239 = vsub.f32 %v71, %v238
    %v240 = vsub.f32 %v72, %v238
    %v241 = vsub.f32 %v73, %v238
    %v242 = vsub.f32 %v74, %v238
    %v243 = vmul.f32 %v223, %v223
    %v244 = vmul.f32 %v224, %v224
    %v245 = vmul.f32 %v225, %v225
    %v246 = vmul.f32 %v226, %v226
    %v247 = vmul.f32 %v231, %v231
    %v248 = vmul.f32 %v232, %v232
    %v249 = vmul.f32 %v233, %v233
    %v250 = vmul.f32 %v234, %v234
    %v251 = vadd.f32 %v243, %v247
    %v252 = vadd.f32 %v244, %v248
    %v253 = vadd.f32 %v245, %v249
    %v254 = vadd.f32 %v246, %v250
    %v255 = vmul.f32 %v239, %v239
    %v256 = vmul.f32 %v240, %v240
    %v257 = vmul.f32 %v241, %v241
    %v258 = vmul.f32 %v242, %v242
    %v259 = vadd.f32 %v251, %v255
    %v260 = vadd.f32 %v252, %v256
    %v261 = vadd.f32 %v253, %v257
    %v262 = vadd.f32 %v254, %v258
    %v263 = vmul.f32 %v259, %v59
    %v264 = vmul.f32 %v260, %v60
    %v265 = vmul.f32 %v261, %v61
    %v266 = vmul.f32 %v262, %v62
    %v267 = vmax.f32 %v263, %v264
    %v268 = vmax.f32 %v265, %v266
    %v269 = vmax.f32 %v267, %v268
    %v270 = vrot.slane %v269, 4
    %v271 = vmax.f32 %v269, %v270
    %v272 = vrot.slane %v271, 2
    %v273 = vmax.f32 %v271, %v272
    %v274 = vrot.slane %v273, 1
    %v275 = vmax.f32 %v273, %v274
    %v276 = vmul.f32 %v275, %v59
    %v277 = vmax.f32 %v276, 0.0
    %v278 = vlaneseq
    %v279 = vshrl.u32 %v278, 7
    %v280 = vsub.s32 1, %v279
    %v281 = vrot.slane %v63, %v280
    %v282 = vsub.f32 %v63, %v281
    %v283 = vsub.f32 %v64, %v281
    %v284 = vsub.f32 %v65, %v281
    %v285 = vsub.f32 %v66, %v281
    %v286 = vlaneseq
    %v287 = vshrl.u32 %v286, 7
    %v288 = vsub.s32 1, %v287
    %v289 = vrot.slane %v67, %v288
    %v290 = vsub.f32 %v67, %v289
    %v291 = vsub.f32 %v68, %v289
    %v292 = vsub.f32 %v69, %v289
    %v293 = vsub.f32 %v70, %v289
    %v294 = vlaneseq
    %v295 = vshrl.u32 %v294, 7
    %v296 = vsub.s32 1, %v295
    %v297 = vrot.slane %v71, %v296
    %v298 = vsub.f32 %v71, %v297
    %v299 = vsub.f32 %v72, %v297
    %v300 = vsub.f32 %v73, %v297
    %v301 = vsub.f32 %v74, %v297
    %v302 = vmul.f32 %v282, %v282
    %v303 = vmul.f32 %v283, %v283
    %v304 = vmul.f32 %v284, %v284
    %v305 = vmul.f32 %v285, %v285
    %v306 = vmul.f32 %v290, %v290
    %v307 = vmul.f32 %v291, %v291
    %v308 = vmul.f32 %v292, %v292
    %v309 = vmul.f32 %v293, %v293
    %v310 = vadd.f32 %v302, %v306
    %v311 = vadd.f32 %v303, %v307
    %v312 = vadd.f32 %v304, %v308
    %v313 = vadd.f32 %v305, %v309
    %v314 = vmul.f32 %v298, %v298
    %v315 = vmul.f32 %v299, %v299
    %v316 = vmul.f32 %v300, %v300
    %v317 = vmul.f32 %v301, %v301
    %v318 = vadd.f32 %v310, %v314
    %v319 = vadd.f32 %v311, %v315
    %v320 = vadd.f32 %v312, %v316
    %v321 = vadd.f32 %v313, %v317
    %v322 = vmul.f32 %v318, %v59
    %v323 = vmul.f32 %v319, %v60
    %v324 = vmul.f32 %v320, %v61
    %v325 = vmul.f32 %v321, %v62
    %v326 = vmax.f32 %v322, %v323
    %v327 = vmax.f32 %v324, %v325
    %v328 = vmax.f32 %v326, %v327
    %v329 = vrot.slane %v328, 4
    %v330 = vmax.f32 %v328, %v329
    %v331 = vrot.slane %v330, 2
    %v332 = vmax.f32 %v330, %v331
    %v333 = vrot.slane %v332, 1
    %v334 = vmax.f32 %v332, %v333
    %v335 = vmul.f32 %v334, %v59
    %v337 = vrot.slane %v335, 1
    %v339 = vmax.f32 %v277, %v337
    %v340 = vlaneseq
    %v341 = vshrl.u32 %v340, 7
    %v342 = vsub.s32 2, %v341
    %v343 = vrot.slane %v63, %v342
    %v344 = vsub.f32 %v63, %v343
    %v345 = vsub.f32 %v64, %v343
    %v346 = vsub.f32 %v65, %v343
    %v347 = vsub.f32 %v66, %v343
    %v348 = vlaneseq
    %v349 = vshrl.u32 %v348, 7
    %v350 = vsub.s32 2, %v349
    %v351 = vrot.slane %v67, %v350
    %v352 = vsub.f32 %v67, %v351
    %v353 = vsub.f32 %v68, %v351
    %v354 = vsub.f32 %v69, %v351
    %v355 = vsub.f32 %v70, %v351
    %v356 = vlaneseq
    %v357 = vshrl.u32 %v356, 7
    %v358 = vsub.s32 2, %v357
    %v359 = vrot.slane %v71, %v358
    %v360 = vsub.f32 %v71, %v359
    %v361 = vsub.f32 %v72, %v359
    %v362 = vsub.f32 %v73, %v359
    %v363 = vsub.f32 %v74, %v359
    %v364 = vmul.f32 %v344, %v344
    %v365 = vmul.f32 %v345, %v345
    %v366 = vmul.f32 %v346, %v346
    %v367 = vmul.f32 %v347, %v347
    %v368 = vmul.f32 %v352, %v352
    %v369 = vmul.f32 %v353, %v353
    %v370 = vmul.f32 %v354, %v354
    %v371 = vmul.f32 %v355, %v355
    %v372 = vadd.f32 %v364, %v368
    %v373 = vadd.f32 %v365, %v369
    %v374 = vadd.f32 %v366, %v370
    %v375 = vadd.f32 %v367, %v371
    %v376 = vmul.f32 %v360, %v360
    %v377 = vmul.f32 %v361, %v361
    %v378 = vmul.f32 %v362, %v362
    %v379 = vmul.f32 %v363, %v363
    %v380 = vadd.f32 %v372, %v376
    %v381 = vadd.f32 %v373, %v377
    %v382 = vadd.f32 %v374, %v378
    %v383 = vadd.f32 %v375, %v379
    %v384 = vmul.f32 %v380, %v59
    %v385 = vmul.f32 %v381, %v60
    %v386 = vmul.f32 %v382, %v61
    %v387 = vmul.f32 %v383, %v62
    %v388 = vmax.f32 %v384, %v385
    %v389 = vmax.f32 %v386, %v387
    %v390 = vmax.f32 %v388, %v389
    %v391 = vrot.slane %v390, 4
    %v392 = vmax.f32 %v390, %v391
    %v393 = vrot.slane %v392, 2
    %v394 = vmax.f32 %v392, %v393
    %v395 = vrot.slane %v394, 1
    %v396 = vmax.f32 %v394, %v395
    %v397 = vmul.f32 %v396, %v59
    %v399 = vrot.slane %v397, 2
    %v401 = vmax.f32 %v339, %v399
    %v402 = vlaneseq
    %v403 = vshrl.u32 %v402, 7
    %v404 = vsub.s32 3, %v403
    %v405 = vrot.slane %v63, %v404
    %v406 = vsub.f32 %v63, %v405
    %v407 = vsub.f32 %v64, %v405
    %v408 = vsub.f32 %v65, %v405
    %v409 = vsub.f32 %v66, %v405
    %v410 = vlaneseq
    %v411 = vshrl.u32 %v410, 7
    %v412 = vsub.s32 3, %v411
    %v413 = vrot.slane %v67, %v412
    %v414 = vsub.f32 %v67, %v413
    %v415 = vsub.f32 %v68, %v413
    %v416 = vsub.f32 %v69, %v413
    %v417 = vsub.f32 %v70, %v413
    %v418 = vlaneseq
    %v419 = vshrl.u32 %v418, 7
    %v420 = vsub.s32 3, %v419
    %v421 = vrot.slane %v71, %v420
    %v422 = vsub.f32 %v71, %v421
    %v423 = vsub.f32 %v72, %v421
    %v424 = vsub.f32 %v73, %v421
    %v425 = vsub.f32 %v74, %v421
    %v426 = vmul.f32 %v406, %v406
    %v427 = vmul.f32 %v407, %v407
    %v428 = vmul.f32 %v408, %v408
    %v429 = vmul.f32 %v409, %v409
    %v430 = vmul.f32 %v414, %v414
    %v431 = vmul.f32 %v415, %v415
    %v432 = vmul.f32 %v416, %v416
    %v433 = vmul.f32 %v417, %v417
    %v434 = vadd.f32 %v426, %v430
    %v435 = vadd.f32 %v427, %v431
    %v436 = vadd.f32 %v428, %v432
    %v437 = vadd.f32 %v429, %v433
    %v438 = vmul.f32 %v422, %v422
    %v439 = vmul.f32 %v423, %v423
    %v440 = vmul.f32 %v424, %v424
    %v441 = vmul.f32 %v425, %v425
    %v442 = vadd.f32 %v434, %v438
    %v443 = vadd.f32 %v435, %v439
    %v444 = vadd.f32 %v436, %v440
    %v445 = vadd.f32 %v437, %v441
    %v446 = vmul.f32 %v442, %v59
    %v447 = vmul.f32 %v443, %v60
    %v448 = vmul.f32 %v444, %v61
    %v449 = vmul.f32 %v445, %v62
    %v450 = vmax.f32 %v446, %v447
    %v451 = vmax.f32 %v448, %v449
    %v452 = vmax.f32 %v450, %v451
    %v453 = vrot.slane %v452, 4
    %v454 = vmax.f32 %v452, %v453
    %v455 = vrot.slane %v454, 2
    %v456 = vmax.f32 %v454, %v455
    %v457 = vrot.slane %v456, 1
    %v458 = vmax.f32 %v456, %v457
    %v459 = vmul.f32 %v458, %v59
    %v461 = vrot.slane %v459, 3
    %v463 = vmax.f32 %v401, %v461
    %v464 = vlaneseq
    %v465 = vshrl.u32 %v464, 7
    %v466 = vsub.s32 4, %v465
    %v467 = vrot.slane %v63, %v466
    %v468 = vsub.f32 %v63, %v467
    %v469 = vsub.f32 %v64, %v467
    %v470 = vsub.f32 %v65, %v467
    %v471 = vsub.f32 %v66, %v467
    %v472 = vlaneseq
    %v473 = vshrl.u32 %v472, 7
    %v474 = vsub.s32 4, %v473
    %v475 = vrot.slane %v67, %v474
    %v476 = vsub.f32 %v67, %v475
    %v477 = vsub.f32 %v68, %v475
    %v478 = vsub.f32 %v69, %v475
    %v479 = vsub.f32 %v70, %v475
    %v480 = vlaneseq
    %v481 = vshrl.u32 %v480, 7
    %v482 = vsub.s32 4, %v481
    %v483 = vrot.slane %v71, %v482
    %v484 = vsub.f32 %v71, %v483
    %v485 = vsub.f32 %v72, %v483
    %v486 = vsub.f32 %v73, %v483
    %v487 = vsub.f32 %v74, %v483
    %v488 = vmul.f32 %v468, %v468
    %v489 = vmul.f32 %v469, %v469
    %v490 = vmul.f32 %v470, %v470
    %v491 = vmul.f32 %v471, %v471
    %v492 = vmul.f32 %v476, %v476
    %v493 = vmul.f32 %v477, %v477
    %v494 = vmul.f32 %v478, %v478
    %v495 = vmul.f32 %v479, %v479
    %v496 = vadd.f32 %v488, %v492
    %v497 = vadd.f32 %v489, %v493
    %v498 = vadd.f32 %v490, %v494
    %v499 = vadd.f32 %v491, %v495
    %v500 = vmul.f32 %v484, %v484
    %v501 = vmul.f32 %v485, %v485
    %v502 = vmul.f32 %v486, %v486
    %v503 = vmul.f32 %v487, %v487
    %v504 = vadd.f32 %v496, %v500
    %v505 = vadd.f32 %v497, %v501
    %v506 = vadd.f32 %v498, %v502
    %v507 = vadd.f32 %v499, %v503
    %v508 = vmul.f32 %v504, %v59
    %v509 = vmul.f32 %v505, %v60
    %v510 = vmul.f32 %v506, %v61
    %v511 = vmul.f32 %v507, %v62
    %v512 = vmax.f32 %v508, %v509
    %v513 = vmax.f32 %v510, %v511
    %v514 = vmax.f32 %v512, %v513
    %v515 = vrot.slane %v514, 4
    %v516 = vmax.f32 %v514, %v515
    %v517 = vrot.slane %v516, 2
    %v518 = vmax.f32 %v516, %v517
    %v519 = vrot.slane %v518, 1
    %v520 = vmax.f32 %v518, %v519
    %v521 = vmul.f32 %v520, %v59
    %v523 = vrot.slane %v521, 4
    %v525 = vmax.f32 %v463, %v523
    %v526 = vlaneseq
    %v527 = vshrl.u32 %v526, 7
    %v528 = vsub.s32 5, %v527
    %v529 = vrot.slane %v63, %v528
    %v530 = vsub.f32 %v63, %v529
    %v531 = vsub.f32 %v64, %v529
    %v532 = vsub.f32 %v65, %v529
    %v533 = vsub.f32 %v66, %v529
    %v534 = vlaneseq
    %v535 = vshrl.u32 %v534, 7
    %v536 = vsub.s32 5, %v535
    %v537 = vrot.slane %v67, %v536
    %v538 = vsub.f32 %v67, %v537
    %v539 = vsub.f32 %v68, %v537
    %v540 = vsub.f32 %v69, %v537
    %v541 = vsub.f32 %v70, %v537
    %v542 = vlaneseq
    %v543 = vshrl.u32 %v542, 7
    %v544 = vsub.s32 5, %v543
    %v545 = vrot.slane %v71, %v544
    %v546 = vsub.f32 %v71, %v545
    %v547 = vsub.f32 %v72, %v545
    %v548 = vsub.f32 %v73, %v545
    %v549 = vsub.f32 %v74, %v545
    %v550 = vmul.f32 %v530, %v530
    %v551 = vmul.f32 %v531, %v531
    %v552 = vmul.f32 %v532, %v532
    %v553 = vmul.f32 %v533, %v533
    %v554 = vmul.f32 %v538, %v538
    %v555 = vmul.f32 %v539, %v539
    %v556 = vmul.f32 %v540, %v540
    %v557 = vmul.f32 %v541, %v541
    %v558 = vadd.f32 %v550, %v554
    %v559 = vadd.f32 %v551, %v555
    %v560 = vadd.f32 %v552, %v556
    %v561 = vadd.f32 %v553, %v557
    %v562 = vmul.f32 %v546, %v546
    %v563 = vmul.f32 %v547, %v547
    %v564 = vmul.f32 %v548, %v548
    %v565 = vmul.f32 %v549, %v549
    %v566 = vadd.f32 %v558, %v562
    %v567 = vadd.f32 %v559, %v563
    %v568 = vadd.f32 %v560, %v564
    %v569 = vadd.f32 %v561, %v565
    %v570 = vmul.f32 %v566, %v59
    %v571 = vmul.f32 %v567, %v60
    %v572 = vmul.f32 %v568, %v61
    %v573 = vmul.f32 %v569, %v62
    %v574 = vmax.f32 %v570, %v571
    %v575 = vmax.f32 %v572, %v573
    %v576 = vmax.f32 %v574, %v575
    %v577 = vrot.slane %v576, 4
    %v578 = vmax.f32 %v576, %v577
    %v579 = vrot.slane %v578, 2
    %v580 = vmax.f32 %v578, %v579
    %v581 = vrot.slane %v580, 1
    %v582 = vmax.f32 %v580, %v581
    %v583 = vmul.f32 %v582, %v59
    %v585 = vrot.slane %v583, 5
    %v587 = vmax.f32 %v525, %v585
    %v588 = vlaneseq
    %v589 = vshrl.u32 %v588, 7
    %v590 = vsub.s32 6, %v589
    %v591 = vrot.slane %v63, %v590
    %v592 = vsub.f32 %v63, %v591
    %v593 = vsub.f32 %v64, %v591
    %v594 = vsub.f32 %v65, %v591
    %v595 = vsub.f32 %v66, %v591
    %v596 = vlaneseq
    %v597 = vshrl.u32 %v596, 7
    %v598 = vsub.s32 6, %v597
    %v599 = vrot.slane %v67, %v598
    %v600 = vsub.f32 %v67, %v599
    %v601 = vsub.f32 %v68, %v599
    %v602 = vsub.f32 %v69, %v599
    %v603 = vsub.f32 %v70, %v599
    %v604 = vlaneseq
    %v605 = vshrl.u32 %v604, 7
    %v606 = vsub.s32 6, %v605
    %v607 = vrot.slane %v71, %v606
    %v608 = vsub.f32 %v71, %v607
    %v609 = vsub.f32 %v72, %v607
    %v610 = vsub.f32 %v73, %v607
    %v611 = vsub.f32 %v74, %v607
    %v612 = vmul.f32 %v592, %v592
    %v613 = vmul.f32 %v593, %v593
    %v614 = vmul.f32 %v594, %v594
    %v615 = vmul.f32 %v595, %v595
    %v616 = vmul.f32 %v600, %v600
    %v617 = vmul.f32 %v601, %v601
    %v618 = vmul.f32 %v602, %v602
    %v619 = vmul.f32 %v603, %v603
    %v620 = vadd.f32 %v612, %v616
    %v621 = vadd.f32 %v613, %v617
    %v622 = vadd.f32 %v614, %v618
    %v623 = vadd.f32 %v615, %v619
    %v624 = vmul.f32 %v608, %v608
    %v625 = vmul.f32 %v609, %v609
    %v626 = vmul.f32 %v610, %v610
    %v627 = vmul.f32 %v611, %v611
    %v628 = vadd.f32 %v620, %v624
    %v629 = vadd.f32 %v621, %v625
    %v630 = vadd.f32 %v622, %v626
    %v631 = vadd.f32 %v623, %v627
    %v632 = vmul.f32 %v628, %v59
    %v633 = vmul.f32 %v629, %v60
    %v634 = vmul.f32 %v630, %v61
    %v635 = vmul.f32 %v631, %v62
    %v636 = vmax.f32 %v632, %v633
    %v637 = vmax.f32 %v634, %v635
    %v638 = vmax.f32 %v636, %v637
    %v639 = vrot.slane %v638, 4
    %v640 = vmax.f32 %v638, %v639
    %v641 = vrot.slane %v640, 2
    %v642 = vmax.f32 %v640, %v641
    %v643 = vrot.slane %v642, 1
    %v644 = vmax.f32 %v642, %v643
    %v645 = vmul.f32 %v644, %v59
    %v647 = vrot.slane %v645, 6
    %v649 = vmax.f32 %v587, %v647
    %v650 = vlaneseq
    %v651 = vshrl.u32 %v650, 7
    %v652 = vsub.s32 7, %v651
    %v653 = vrot.slane %v63, %v652
    %v654 = vsub.f32 %v63, %v653
    %v655 = vsub.f32 %v64, %v653
    %v656 = vsub.f32 %v65, %v653
    %v657 = vsub.f32 %v66, %v653
    %v658 = vlaneseq
    %v659 = vshrl.u32 %v658, 7
    %v660 = vsub.s32 7, %v659
    %v661 = vrot.slane %v67, %v660
    %v662 = vsub.f32 %v67, %v661
    %v663 = vsub.f32 %v68, %v661
    %v664 = vsub.f32 %v69, %v661
    %v665 = vsub.f32 %v70, %v661
    %v666 = vlaneseq
    %v667 = vshrl.u32 %v666, 7
    %v668 = vsub.s32 7, %v667
    %v669 = vrot.slane %v71, %v668
    %v670 = vsub.f32 %v71, %v669
    %v671 = vsub.f32 %v72, %v669
    %v672 = vsub.f32 %v73, %v669
    %v673 = vsub.f32 %v74, %v669
    %v674 = vmul.f32 %v654, %v654
    %v675 = vmul.f32 %v655, %v655
    %v676 = vmul.f32 %v656, %v656
    %v677 = vmul.f32 %v657, %v657
    %v678 = vmul.f32 %v662, %v662
    %v679 = vmul.f32 %v663, %v663
    %v680 = vmul.f32 %v664, %v664
    %v681 = vmul.f32 %v665, %v665
    %v682 = vadd.f32 %v674, %v678
    %v683 = vadd.f32 %v675, %v679
    %v684 = vadd.f32 %v676, %v680
    %v685 = vadd.f32 %v677, %v681
    %v686 = vmul.f32 %v670, %v670
    %v687 = vmul.f32 %v671, %v671
    %v688 = vmul.f32 %v672, %v672
    %v689 = vmul.f32 %v673, %v673
    %v690 = vadd.f32 %v682, %v686
    %v691 = vadd.f32 %v683, %v687
    %v692 = vadd.f32 %v684, %v688
    %v693 = vadd.f32 %v685, %v689
    %v694 = vmul.f32 %v690, %v59
    %v695 = vmul.f32 %v691, %v60
    %v696 = vmul.f32 %v692, %v61
    %v697 = vmul.f32 %v693, %v62
    %v698 = vmax.f32 %v694, %v695
    %v699 = vmax.f32 %v696, %v697
    %v700 = vmax.f32 %v698, %v699
    %v701 = vrot.slane %v700, 4
    %v702 = vmax.f32 %v700, %v701
    %v703 = vrot.slane %v702, 2
    %v704 = vmax.f32 %v702, %v703
    %v705 = vrot.slane %v704, 1
    %v706 = vmax.f32 %v704, %v705
    %v707 = vmul.f32 %v706, %v59
    %v709 = vrot.slane %v707, 7
    %v711 = vmax.f32 %v649, %v709
    %v712 = vlaneseq
    %v713 = vshrl.u32 %v712, 7
    %v714 = vsub.s32 0, %v713
    %v715 = vrot.slane %v64, %v714
    %v716 = vsub.f32 %v63, %v715
    %v717 = vsub.f32 %v64, %v715
    %v718 = vsub.f32 %v65, %v715
    %v719 = vsub.f32 %v66, %v715
    %v720 = vlaneseq
    %v721 = vshrl.u32 %v720, 7
    %v722 = vsub.s32 0, %v721
    %v723 = vrot.slane %v68, %v722
    %v724 = vsub.f32 %v67, %v723
    %v725 = vsub.f32 %v68, %v723
    %v726 = vsub.f32 %v69, %v723
    %v727 = vsub.f32 %v70, %v723
    %v728 = vlaneseq
    %v729 = vshrl.u32 %v728, 7
    %v730 = vsub.s32 0, %v729
    %v731 = vrot.slane %v72, %v730
    %v732 = vsub.f32 %v71, %v731
    %v733 = vsub.f32 %v72, %v731
    %v734 = vsub.f32 %v73, %v731
    %v735 = vsub.f32 %v74, %v731
    %v736 = vmul.f32 %v716, %v716
    %v737 = vmul.f32 %v717, %v717
    %v738 = vmul.f32 %v718, %v718
    %v739 = vmul.f32 %v719, %v719
    %v740 = vmul.f32 %v724, %v724
    %v741 = vmul.f32 %v725, %v725
    %v742 = vmul.f32 %v726, %v726
    %v743 = vmul.f32 %v727, %v727
    %v744 = vadd.f32 %v736, %v740
    %v745 = vadd.f32 %v737, %v741
    %v746 = vadd.f32 %v738, %v742
    %v747 = vadd.f32 %v739, %v743
    %v748 = vmul.f32 %v732, %v732
    %v749 = vmul.f32 %v733, %v733
    %v750 = vmul.f32 %v734, %v734
    %v751 = vmul.f32 %v735, %v735
    %v752 = vadd.f32 %v744, %v748
    %v753 = vadd.f32 %v745, %v749
    %v754 = vadd.f32 %v746, %v750
    %v755 = vadd.f32 %v747, %v751
    %v756 = vmul.f32 %v752, %v59
    %v757 = vmul.f32 %v753, %v60
    %v758 = vmul.f32 %v754, %v61
    %v759 = vmul.f32 %v755, %v62
    %v760 = vmax.f32 %v756, %v757
    %v761 = vmax.f32 %v758, %v759
    %v762 = vmax.f32 %v760, %v761
    %v763 = vrot.slane %v762, 4
    %v764 = vmax.f32 %v762, %v763
    %v765 = vrot.slane %v764, 2
    %v766 = vmax.f32 %v764, %v765
    %v767 = vrot.slane %v766, 1
    %v768 = vmax.f32 %v766, %v767
    %v769 = vmul.f32 %v768, %v60
    %v770 = vmax.f32 %v711, %v769
    %v771 = vlaneseq
    %v772 = vshrl.u32 %v771, 7
    %v773 = vsub.s32 1, %v772
    %v774 = vrot.slane %v64, %v773
    %v775 = vsub.f32 %v63, %v774
    %v776 = vsub.f32 %v64, %v774
    %v777 = vsub.f32 %v65, %v774
    %v778 = vsub.f32 %v66, %v774
    %v779 = vlaneseq
    %v780 = vshrl.u32 %v779, 7
    %v781 = vsub.s32 1, %v780
    %v782 = vrot.slane %v68, %v781
    %v783 = vsub.f32 %v67, %v782
    %v784 = vsub.f32 %v68, %v782
    %v785 = vsub.f32 %v69, %v782
    %v786 = vsub.f32 %v70, %v782
    %v787 = vlaneseq
    %v788 = vshrl.u32 %v787, 7
    %v789 = vsub.s32 1, %v788
    %v790 = vrot.slane %v72, %v789
    %v791 = vsub.f32 %v71, %v790
    %v792 = vsub.f32 %v72, %v790
    %v793 = vsub.f32 %v73, %v790
    %v794 = vsub.f32 %v74, %v790
    %v795 = vmul.f32 %v775, %v775
    %v796 = vmul.f32 %v776, %v776
    %v797 = vmul.f32 %v777, %v777
    %v798 = vmul.f32 %v778, %v778
    %v799 = vmul.f32 %v783, %v783
    %v800 = vmul.f32 %v784, %v784
    %v801 = vmul.f32 %v785, %v785
    %v802 = vmul.f32 %v786, %v786
    %v803 = vadd.f32 %v795, %v799
    %v804 = vadd.f32 %v796, %v800
    %v805 = vadd.f32 %v797, %v801
    %v806 = vadd.f32 %v798, %v802
    %v807 = vmul.f32 %v791, %v791
    %v808 = vmul.f32 %v792, %v792
    %v809 = vmul.f32 %v793, %v793
    %v810 = vmul.f32 %v794, %v794
    %v811 = vadd.f32 %v803, %v807
    %v812 = vadd.f32 %v804, %v808
    %v813 = vadd.f32 %v805, %v809
    %v814 = vadd.f32 %v806, %v810
    %v815 = vmul.f32 %v811, %v59
    %v816 = vmul.f32 %v812, %v60
    %v817 = vmul.f32 %v813, %v61
    %v818 = vmul.f32 %v814, %v62
    %v819 = vmax.f32 %v815, %v816
    %v820 = vmax.f32 %v817, %v818
    %v821 = vmax.f32 %v819, %v820
    %v822 = vrot.slane %v821, 4
    %v823 = vmax.f32 %v821, %v822
    %v824 = vrot.slane %v823, 2
    %v825 = vmax.f32 %v823, %v824
    %v826 = vrot.slane %v825, 1
    %v827 = vmax.f32 %v825, %v826
    %v828 = vmul.f32 %v827, %v60
    %v830 = vrot.slane %v828, 1
    %v832 = vmax.f32 %v770, %v830
    %v833 = vlaneseq
    %v834 = vshrl.u32 %v833, 7
    %v835 = vsub.s32 2, %v834
    %v836 = vrot.slane %v64, %v835
    %v837 = vsub.f32 %v63, %v836
    %v838 = vsub.f32 %v64, %v836
    %v839 = vsub.f32 %v65, %v836
    %v840 = vsub.f32 %v66, %v836
    %v841 = vlaneseq
    %v842 = vshrl.u32 %v841, 7
    %v843 = vsub.s32 2, %v842
    %v844 = vrot.slane %v68, %v843
    %v845 = vsub.f32 %v67, %v844
    %v846 = vsub.f32 %v68, %v844
    %v847 = vsub.f32 %v69, %v844
    %v848 = vsub.f32 %v70, %v844
    %v849 = vlaneseq
    %v850 = vshrl.u32 %v849, 7
    %v851 = vsub.s32 2, %v850
    %v852 = vrot.slane %v72, %v851
    %v853 = vsub.f32 %v71, %v852
    %v854 = vsub.f32 %v72, %v852
    %v855 = vsub.f32 %v73, %v852
    %v856 = vsub.f32 %v74, %v852
    %v857 = vmul.f32 %v837, %v837
    %v858 = vmul.f32 %v838, %v838
    %v859 = vmul.f32 %v839, %v839
    %v860 = vmul.f32 %v840, %v840
    %v861 = vmul.f32 %v845, %v845
    %v862 = vmul.f32 %v846, %v846
    %v863 = vmul.f32 %v847, %v847
    %v864 = vmul.f32 %v848, %v848
    %v865 = vadd.f32 %v857, %v861
    %v866 = vadd.f32 %v858, %v862
    %v867 = vadd.f32 %v859, %v863
    %v868 = vadd.f32 %v860, %v864
    %v869 = vmul.f32 %v853, %v853
    %v870 = vmul.f32 %v854, %v854
    %v871 = vmul.f32 %v855, %v855
    %v872 = vmul.f32 %v856, %v856
    %v873 = vadd.f32 %v865, %v869
    %v874 = vadd.f32 %v866, %v870
    %v875 = vadd.f32 %v867, %v871
    %v876 = vadd.f32 %v868, %v872
    %v877 = vmul.f32 %v873, %v59
    %v878 = vmul.f32 %v874, %v60
    %v879 = vmul.f32 %v875, %v61
    %v880 = vmul.f32 %v876, %v62
    %v881 = vmax.f32 %v877, %v878
    %v882 = vmax.f32 %v879, %v880
    %v883 = vmax.f32 %v881, %v882
    %v884 = vrot.slane %v883, 4
    %v885 = vmax.f32 %v883, %v884
    %v886 = vrot.slane %v885, 2
    %v887 = vmax.f32 %v885, %v886
    %v888 = vrot.slane %v887, 1
    %v889 = vmax.f32 %v887, %v888
    %v890 = vmul.f32 %v889, %v60
    %v892 = vrot.slane %v890, 2
    %v894 = vmax.f32 %v832, %v892
    %v895 = vlaneseq
    %v896 = vshrl.u32 %v895, 7
    %v897 = vsub.s32 3, %v896
    %v898 = vrot.slane %v64, %v897
    %v899 = vsub.f32 %v63, %v898
    %v900 = vsub.f32 %v64, %v898
    %v901 = vsub.f32 %v65, %v898
    %v902 = vsub.f32 %v66, %v898
    %v903 = vlaneseq
    %v904 = vshrl.u32 %v903, 7
    %v905 = vsub.s32 3, %v904
    %v906 = vrot.slane %v68, %v905
    %v907 = vsub.f32 %v67, %v906
    %v908 = vsub.f32 %v68, %v906
    %v909 = vsub.f32 %v69, %v906
    %v910 = vsub.f32 %v70, %v906
    %v911 = vlaneseq
    %v912 = vshrl.u32 %v911, 7
    %v913 = vsub.s32 3, %v912
    %v914 = vrot.slane %v72, %v913
    %v915 = vsub.f32 %v71, %v914
    %v916 = vsub.f32 %v72, %v914
    %v917 = vsub.f32 %v73, %v914
    %v918 = vsub.f32 %v74, %v914
    %v919 = vmul.f32 %v899, %v899
    %v920 = vmul.f32 %v900, %v900
    %v921 = vmul.f32 %v901, %v901
    %v922 = vmul.f32 %v902, %v902
    %v923 = vmul.f32 %v907, %v907
    %v924 = vmul.f32 %v908, %v908
    %v925 = vmul.f32 %v909, %v909
    %v926 = vmul.f32 %v910, %v910
    %v927 = vadd.f32 %v919, %v923
    %v928 = vadd.f32 %v920, %v924
    %v929 = vadd.f32 %v921, %v925
    %v930 = vadd.f32 %v922, %v926
    %v931 = vmul.f32 %v915, %v915
    %v932 = vmul.f32 %v916, %v916
    %v933 = vmul.f32 %v917, %v917
    %v934 = vmul.f32 %v918, %v918
    %v935 = vadd.f32 %v927, %v931
    %v936 = vadd.f32 %v928, %v932
    %v937 = vadd.f32 %v929, %v933
    %v938 = vadd.f32 %v930, %v934
    %v939 = vmul.f32 %v935, %v59
    %v940 = vmul.f32 %v936, %v60
    %v941 = vmul.f32 %v937, %v61
    %v942 = vmul.f32 %v938, %v62
    %v943 = vmax.f32 %v939, %v940
    %v944 = vmax.f32 %v941, %v942
    %v945 = vmax.f32 %v943, %v944
    %v946 = vrot.slane %v945, 4
    %v947 = vmax.f32 %v945, %v946
    %v948 = vrot.slane %v947, 2
    %v949 = vmax.f32 %v947, %v948
    %v950 = vrot.slane %v949, 1
    %v951 = vmax.f32 %v949, %v950
    %v952 = vmul.f32 %v951, %v60
    %v954 = vrot.slane %v952, 3
    %v956 = vmax.f32 %v894, %v954
    %v957 = vlaneseq
    %v958 = vshrl.u32 %v957, 7
    %v959 = vsub.s32 4, %v958
    %v960 = vrot.slane %v64, %v959
    %v961 = vsub.f32 %v63, %v960
    %v962 = vsub.f32 %v64, %v960
    %v963 = vsub.f32 %v65, %v960
    %v964 = vsub.f32 %v66, %v960
    %v965 = vlaneseq
    %v966 = vshrl.u32 %v965, 7
    %v967 = vsub.s32 4, %v966
    %v968 = vrot.slane %v68, %v967
    %v969 = vsub.f32 %v67, %v968
    %v970 = vsub.f32 %v68, %v968
    %v971 = vsub.f32 %v69, %v968
    %v972 = vsub.f32 %v70, %v968
    %v973 = vlaneseq
    %v974 = vshrl.u32 %v973, 7
    %v975 = vsub.s32 4, %v974
    %v976 = vrot.slane %v72, %v975
    %v977 = vsub.f32 %v71, %v976
    %v978 = vsub.f32 %v72, %v976
    %v979 = vsub.f32 %v73, %v976
    %v980 = vsub.f32 %v74, %v976
    %v981 = vmul.f32 %v961, %v961
    %v982 = vmul.f32 %v962, %v962
    %v983 = vmul.f32 %v963, %v963
    %v984 = vmul.f32 %v964, %v964
    %v985 = vmul.f32 %v969, %v969
    %v986 = vmul.f32 %v970, %v970
    %v987 = vmul.f32 %v971, %v971
    %v988 = vmul.f32 %v972, %v972
    %v989 = vadd.f32 %v981, %v985
    %v990 = vadd.f32 %v982, %v986
    %v991 = vadd.f32 %v983, %v987
    %v992 = vadd.f32 %v984, %v988
    %v993 = vmul.f32 %v977, %v977
    %v994 = vmul.f32 %v978, %v978
    %v995 = vmul.f32 %v979, %v979
    %v996 = vmul.f32 %v980, %v980
    %v997 = vadd.f32 %v989, %v993
    %v998 = vadd.f32 %v990, %v994
    %v999 = vadd.f32 %v991, %v995
    %v1000 = vadd.f32 %v992, %v996
    %v1001 = vmul.f32 %v997, %v59
    %v1002 = vmul.f32 %v998, %v60
    %v1003 = vmul.f32 %v999, %v61
    %v1004 = vmul.f32 %v1000, %v62
    %v1005 = vmax.f32 %v1001, %v1002
    %v1006 = vmax.f32 %v1003, %v1004
    %v1007 = vmax.f32 %v1005, %v1006
    %v1008 = vrot.slane %v1007, 4
    %v1009 = vmax.f32 %v1007, %v1008
    %v1010 = vrot.slane %v1009, 2
    %v1011 = vmax.f32 %v1009, %v1010
    %v1012 = vrot.slane %v1011, 1
    %v1013 = vmax.f32 %v1011, %v1012
    %v1014 = vmul.f32 %v1013, %v60
    %v1016 = vrot.slane %v1014, 4
    %v1018 = vmax.f32 %v956, %v1016
    %v1019 = vlaneseq
    %v1020 = vshrl.u32 %v1019, 7
    %v1021 = vsub.s32 5, %v1020
    %v1022 = vrot.slane %v64, %v1021
    %v1023 = vsub.f32 %v63, %v1022
    %v1024 = vsub.f32 %v64, %v1022
    %v1025 = vsub.f32 %v65, %v1022
    %v1026 = vsub.f32 %v66, %v1022
    %v1027 = vlaneseq
    %v1028 = vshrl.u32 %v1027, 7
    %v1029 = vsub.s32 5, %v1028
    %v1030 = vrot.slane %v68, %v1029
    %v1031 = vsub.f32 %v67, %v1030
    %v1032 = vsub.f32 %v68, %v1030
    %v1033 = vsub.f32 %v69, %v1030
    %v1034 = vsub.f32 %v70, %v1030
    %v1035 = vlaneseq
    %v1036 = vshrl.u32 %v1035, 7
    %v1037 = vsub.s32 5, %v1036
    %v1038 = vrot.slane %v72, %v1037
    %v1039 = vsub.f32 %v71, %v1038
    %v1040 = vsub.f32 %v72, %v1038
    %v1041 = vsub.f32 %v73, %v1038
    %v1042 = vsub.f32 %v74, %v1038
    %v1043 = vmul.f32 %v1023, %v1023
    %v1044 = vmul.f32 %v1024, %v1024
    %v1045 = vmul.f32 %v1025, %v1025
    %v1046 = vmul.f32 %v1026, %v1026
    %v1047 = vmul.f32 %v1031, %v1031
    %v1048 = vmul.f32 %v1032, %v1032
    %v1049 = vmul.f32 %v1033, %v1033
    %v1050 = vmul.f32 %v1034, %v1034
    %v1051 = vadd.f32 %v1043, %v1047
    %v1052 = vadd.f32 %v1044, %v1048
    %v1053 = vadd.f32 %v1045, %v1049
    %v1054 = vadd.f32 %v1046, %v1050
    %v1055 = vmul.f32 %v1039, %v1039
    %v1056 = vmul.f32 %v1040, %v1040
    %v1057 = vmul.f32 %v1041, %v1041
    %v1058 = vmul.f32 %v1042, %v1042
    %v1059 = vadd.f32 %v1051, %v1055
    %v1060 = vadd.f32 %v1052, %v1056
    %v1061 = vadd.f32 %v1053, %v1057
    %v1062 = vadd.f32 %v1054, %v1058
    %v1063 = vmul.f32 %v1059, %v59
    %v1064 = vmul.f32 %v1060, %v60
    %v1065 = vmul.f32 %v1061, %v61
    %v1066 = vmul.f32 %v1062, %v62
    %v1067 = vmax.f32 %v1063, %v1064
    %v1068 = vmax.f32 %v1065, %v1066
    %v1069 = vmax.f32 %v1067, %v1068
    %v1070 = vrot.slane %v1069, 4
    %v1071 = vmax.f32 %v1069, %v1070
    %v1072 = vrot.slane %v1071, 2
    %v1073 = vmax.f32 %v1071, %v1072
    %v1074 = vrot.slane %v1073, 1
    %v1075 = vmax.f32 %v1073, %v1074
    %v1076 = vmul.f32 %v1075, %v60
    %v1078 = vrot.slane %v1076, 5
    %v1080 = vmax.f32 %v1018, %v1078
    %v1081 = vlaneseq
    %v1082 = vshrl.u32 %v1081, 7
    %v1083 = vsub.s32 6, %v1082
    %v1084 = vrot.slane %v64, %v1083
    %v1085 = vsub.f32 %v63, %v1084
    %v1086 = vsub.f32 %v64, %v1084
    %v1087 = vsub.f32 %v65, %v1084
    %v1088 = vsub.f32 %v66, %v1084
    %v1089 = vlaneseq
    %v1090 = vshrl.u32 %v1089, 7
    %v1091 = vsub.s32 6, %v1090
    %v1092 = vrot.slane %v68, %v1091
    %v1093 = vsub.f32 %v67, %v1092
    %v1094 = vsub.f32 %v68, %v1092
    %v1095 = vsub.f32 %v69, %v1092
    %v1096 = vsub.f32 %v70, %v1092
    %v1097 = vlaneseq
    %v1098 = vshrl.u32 %v1097, 7
    %v1099 = vsub.s32 6, %v1098
    %v1100 = vrot.slane %v72, %v1099
    %v1101 = vsub.f32 %v71, %v1100
    %v1102 = vsub.f32 %v72, %v1100
    %v1103 = vsub.f32 %v73, %v1100
    %v1104 = vsub.f32 %v74, %v1100
    %v1105 = vmul.f32 %v1085, %v1085
    %v1106 = vmul.f32 %v1086, %v1086
    %v1107 = vmul.f32 %v1087, %v1087
    %v1108 = vmul.f32 %v1088, %v1088
    %v1109 = vmul.f32 %v1093, %v1093
    %v1110 = vmul.f32 %v1094, %v1094
    %v1111 = vmul.f32 %v1095, %v1095
    %v1112 = vmul.f32 %v1096, %v1096
    %v1113 = vadd.f32 %v1105, %v1109
    %v1114 = vadd.f32 %v1106, %v1110
    %v1115 = vadd.f32 %v1107, %v1111
    %v1116 = vadd.f32 %v1108, %v1112
    %v1117 = vmul.f32 %v1101, %v1101
    %v1118 = vmul.f32 %v1102, %v1102
    %v1119 = vmul.f32 %v1103, %v1103
    %v1120 = vmul.f32 %v1104, %v1104
    %v1121 = vadd.f32 %v1113, %v1117
    %v1122 = vadd.f32 %v1114, %v1118
    %v1123 = vadd.f32 %v1115, %v1119
    %v1124 = vadd.f32 %v1116, %v1120
    %v1125 = vmul.f32 %v1121, %v59
    %v1126 = vmul.f32 %v1122, %v60
    %v1127 = vmul.f32 %v1123, %v61
    %v1128 = vmul.f32 %v1124, %v62
    %v1129 = vmax.f32 %v1125, %v1126
    %v1130 = vmax.f32 %v1127, %v1128
    %v1131 = vmax.f32 %v1129, %v1130
    %v1132 = vrot.slane %v1131, 4
    %v1133 = vmax.f32 %v1131, %v1132
    %v1134 = vrot.slane %v1133, 2
    %v1135 = vmax.f32 %v1133, %v1134
    %v1136 = vrot.slane %v1135, 1
    %v1137 = vmax.f32 %v1135, %v1136
    %v1138 = vmul.f32 %v1137, %v60
    %v1140 = vrot.slane %v1138, 6
    %v1142 = vmax.f32 %v1080, %v1140
    %v1143 = vlaneseq
    %v1144 = vshrl.u32 %v1143, 7
    %v1145 = vsub.s32 7, %v1144
    %v1146 = vrot.slane %v64, %v1145
    %v1147 = vsub.f32 %v63, %v1146
    %v1148 = vsub.f32 %v64, %v1146
    %v1149 = vsub.f32 %v65, %v1146
    %v1150 = vsub.f32 %v66, %v1146
    %v1151 = vlaneseq
    %v1152 = vshrl.u32 %v1151, 7
    %v1153 = vsub.s32 7, %v1152
    %v1154 = vrot.slane %v68, %v1153
    %v1155 = vsub.f32 %v67, %v1154
    %v1156 = vsub.f32 %v68, %v1154
    %v1157 = vsub.f32 %v69, %v1154
    %v1158 = vsub.f32 %v70, %v1154
    %v1159 = vlaneseq
    %v1160 = vshrl.u32 %v1159, 7
    %v1161 = vsub.s32 7, %v1160
    %v1162 = vrot.slane %v72, %v1161
    %v1163 = vsub.f32 %v71, %v1162
    %v1164 = vsub.f32 %v72, %v1162
    %v1165 = vsub.f32 %v73, %v1162
    %v1166 = vsub.f32 %v74, %v1162
    %v1167 = vmul.f32 %v1147, %v1147
    %v1168 = vmul.f32 %v1148, %v1148
    %v1169 = vmul.f32 %v1149, %v1149
    %v1170 = vmul.f32 %v1150, %v1150
    %v1171 = vmul.f32 %v1155, %v1155
    %v1172 = vmul.f32 %v1156, %v1156
    %v1173 = vmul.f32 %v1157, %v1157
    %v1174 = vmul.f32 %v1158, %v1158
    %v1175 = vadd.f32 %v1167, %v1171
    %v1176 = vadd.f32 %v1168, %v1172
    %v1177 = vadd.f32 %v1169, %v1173
    %v1178 = vadd.f32 %v1170, %v1174
    %v1179 = vmul.f32 %v1163, %v1163
    %v1180 = vmul.f32 %v1164, %v1164
    %v1181 = vmul.f32 %v1165, %v1165
    %v1182 = vmul.f32 %v1166, %v1166
    %v1183 = vadd.f32 %v1175, %v1179
    %v1184 = vadd.f32 %v1176, %v1180
    %v1185 = vadd.f32 %v1177, %v1181
    %v1186 = vadd.f32 %v1178, %v1182
    %v1187 = vmul.f32 %v1183, %v59
    %v1188 = vmul.f32 %v1184, %v60
    %v1189 = vmul.f32 %v1185, %v61
    %v1190 = vmul.f32 %v1186, %v62
    %v1191 = vmax.f32 %v1187, %v1188
    %v1192 = vmax.f32 %v1189, %v1190
    %v1193 = vmax.f32 %v1191, %v1192
    %v1194 = vrot.slane %v1193, 4
    %v1195 = vmax.f32 %v1193, %v1194
    %v1196 = vrot.slane %v1195, 2
    %v1197 = vmax.f32 %v1195, %v1196
    %v1198 = vrot.slane %v1197, 1
    %v1199 = vmax.f32 %v1197, %v1198
    %v1200 = vmul.f32 %v1199, %v60
    %v1202 = vrot.slane %v1200, 7
    %v1204 = vmax.f32 %v1142, %v1202
    %v1205 = vlaneseq
    %v1206 = vshrl.u32 %v1205, 7
    %v1207 = vsub.s32 0, %v1206
    %v1208 = vrot.slane %v65, %v1207
    %v1209 = vsub.f32 %v63, %v1208
    %v1210 = vsub.f32 %v64, %v1208
    %v1211 = vsub.f32 %v65, %v1208
    %v1212 = vsub.f32 %v66, %v1208
    %v1213 = vlaneseq
    %v1214 = vshrl.u32 %v1213, 7
    %v1215 = vsub.s32 0, %v1214
    %v1216 = vrot.slane %v69, %v1215
    %v1217 = vsub.f32 %v67, %v1216
    %v1218 = vsub.f32 %v68, %v1216
    %v1219 = vsub.f32 %v69, %v1216
    %v1220 = vsub.f32 %v70, %v1216
    %v1221 = vlaneseq
    %v1222 = vshrl.u32 %v1221, 7
    %v1223 = vsub.s32 0, %v1222
    %v1224 = vrot.slane %v73, %v1223
    %v1225 = vsub.f32 %v71, %v1224
    %v1226 = vsub.f32 %v72, %v1224
    %v1227 = vsub.f32 %v73, %v1224
    %v1228 = vsub.f32 %v74, %v1224
    %v1229 = vmul.f32 %v1209, %v1209
    %v1230 = vmul.f32 %v1210, %v1210
    %v1231 = vmul.f32 %v1211, %v1211
    %v1232 = vmul.f32 %v1212, %v1212
    %v1233 = vmul.f32 %v1217, %v1217
    %v1234 = vmul.f32 %v1218, %v1218
    %v1235 = vmul.f32 %v1219, %v1219
    %v1236 = vmul.f32 %v1220, %v1220
    %v1237 = vadd.f32 %v1229, %v1233
    %v1238 = vadd.f32 %v1230, %v1234
    %v1239 = vadd.f32 %v1231, %v1235
    %v1240 = vadd.f32 %v1232, %v1236
    %v1241 = vmul.f32 %v1225, %v1225
    %v1242 = vmul.f32 %v1226, %v1226
    %v1243 = vmul.f32 %v1227, %v1227
    %v1244 = vmul.f32 %v1228, %v1228
    %v1245 = vadd.f32 %v1237, %v1241
    %v1246 = vadd.f32 %v1238, %v1242
    %v1247 = vadd.f32 %v1239, %v1243
    %v1248 = vadd.f32 %v1240, %v1244
    %v1249 = vmul.f32 %v1245, %v59
    %v1250 = vmul.f32 %v1246, %v60
    %v1251 = vmul.f32 %v1247, %v61
    %v1252 = vmul.f32 %v1248, %v62
    %v1253 = vmax.f32 %v1249, %v1250
    %v1254 = vmax.f32 %v1251, %v1252
    %v1255 = vmax.f32 %v1253, %v1254
    %v1256 = vrot.slane %v1255, 4
    %v1257 = vmax.f32 %v1255, %v1256
    %v1258 = vrot.slane %v1257, 2
    %v1259 = vmax.f32 %v1257, %v1258
    %v1260 = vrot.slane %v1259, 1
    %v1261 = vmax.f32 %v1259, %v1260
    %v1262 = vmul.f32 %v1261, %v61
    %v1263 = vmax.f32 %v1204, %v1262
    %v1264 = vlaneseq
    %v1265 = vshrl.u32 %v1264, 7
    %v1266 = vsub.s32 1, %v1265
    %v1267 = vrot.slane %v65, %v1266
    %v1268 = vsub.f32 %v63, %v1267
    %v1269 = vsub.f32 %v64, %v1267
    %v1270 = vsub.f32 %v65, %v1267
    %v1271 = vsub.f32 %v66, %v1267
    %v1272 = vlaneseq
    %v1273 = vshrl.u32 %v1272, 7
    %v1274 = vsub.s32 1, %v1273
    %v1275 = vrot.slane %v69, %v1274
    %v1276 = vsub.f32 %v67, %v1275
    %v1277 = vsub.f32 %v68, %v1275
    %v1278 = vsub.f32 %v69, %v1275
    %v1279 = vsub.f32 %v70, %v1275
    %v1280 = vlaneseq
    %v1281 = vshrl.u32 %v1280, 7
    %v1282 = vsub.s32 1, %v1281
    %v1283 = vrot.slane %v73, %v1282
    %v1284 = vsub.f32 %v71, %v1283
    %v1285 = vsub.f32 %v72, %v1283
    %v1286 = vsub.f32 %v73, %v1283
    %v1287 = vsub.f32 %v74, %v1283
    %v1288 = vmul.f32 %v1268, %v1268
    %v1289 = vmul.f32 %v1269, %v1269
    %v1290 = vmul.f32 %v1270, %v1270
    %v1291 = vmul.f32 %v1271, %v1271
    %v1292 = vmul.f32 %v1276, %v1276
    %v1293 = vmul.f32 %v1277, %v1277
    %v1294 = vmul.f32 %v1278, %v1278
    %v1295 = vmul.f32 %v1279, %v1279
    %v1296 = vadd.f32 %v1288, %v1292
    %v1297 = vadd.f32 %v1289, %v1293
    %v1298 = vadd.f32 %v1290, %v1294
    %v1299 = vadd.f32 %v1291, %v1295
    %v1300 = vmul.f32 %v1284, %v1284
    %v1301 = vmul.f32 %v1285, %v1285
    %v1302 = vmul.f32 %v1286, %v1286
    %v1303 = vmul.f32 %v1287, %v1287
    %v1304 = vadd.f32 %v1296, %v1300
    %v1305 = vadd.f32 %v1297, %v1301
    %v1306 = vadd.f32 %v1298, %v1302
    %v1307 = vadd.f32 %v1299, %v1303
    %v1308 = vmul.f32 %v1304, %v59
    %v1309 = vmul.f32 %v1305, %v60
    %v1310 = vmul.f32 %v1306, %v61
    %v1311 = vmul.f32 %v1307, %v62
    %v1312 = vmax.f32 %v1308, %v1309
    %v1313 = vmax.f32 %v1310, %v1311
    %v1314 = vmax.f32 %v1312, %v1313
    %v1315 = vrot.slane %v1314, 4
    %v1316 = vmax.f32 %v1314, %v1315
    %v1317 = vrot.slane %v1316, 2
    %v1318 = vmax.f32 %v1316, %v1317
    %v1319 = vrot.slane %v1318, 1
    %v1320 = vmax.f32 %v1318, %v1319
    %v1321 = vmul.f32 %v1320, %v61
    %v1323 = vrot.slane %v1321, 1
    %v1325 = vmax.f32 %v1263, %v1323
    %v1326 = vlaneseq
    %v1327 = vshrl.u32 %v1326, 7
    %v1328 = vsub.s32 2, %v1327
    %v1329 = vrot.slane %v65, %v1328
    %v1330 = vsub.f32 %v63, %v1329
    %v1331 = vsub.f32 %v64, %v1329
    %v1332 = vsub.f32 %v65, %v1329
    %v1333 = vsub.f32 %v66, %v1329
    %v1334 = vlaneseq
    %v1335 = vshrl.u32 %v1334, 7
    %v1336 = vsub.s32 2, %v1335
    %v1337 = vrot.slane %v69, %v1336
    %v1338 = vsub.f32 %v67, %v1337
    %v1339 = vsub.f32 %v68, %v1337
    %v1340 = vsub.f32 %v69, %v1337
    %v1341 = vsub.f32 %v70, %v1337
    %v1342 = vlaneseq
    %v1343 = vshrl.u32 %v1342, 7
    %v1344 = vsub.s32 2, %v1343
    %v1345 = vrot.slane %v73, %v1344
    %v1346 = vsub.f32 %v71, %v1345
    %v1347 = vsub.f32 %v72, %v1345
    %v1348 = vsub.f32 %v73, %v1345
    %v1349 = vsub.f32 %v74, %v1345
    %v1350 = vmul.f32 %v1330, %v1330
    %v1351 = vmul.f32 %v1331, %v1331
    %v1352 = vmul.f32 %v1332, %v1332
    %v1353 = vmul.f32 %v1333, %v1333
    %v1354 = vmul.f32 %v1338, %v1338
    %v1355 = vmul.f32 %v1339, %v1339
    %v1356 = vmul.f32 %v1340, %v1340
    %v1357 = vmul.f32 %v1341, %v1341
    %v1358 = vadd.f32 %v1350, %v1354
    %v1359 = vadd.f32 %v1351, %v1355
    %v1360 = vadd.f32 %v1352, %v1356
    %v1361 = vadd.f32 %v1353, %v1357
    %v1362 = vmul.f32 %v1346, %v1346
    %v1363 = vmul.f32 %v1347, %v1347
    %v1364 = vmul.f32 %v1348, %v1348
    %v1365 = vmul.f32 %v1349, %v1349
    %v1366 = vadd.f32 %v1358, %v1362
    %v1367 = vadd.f32 %v1359, %v1363
    %v1368 = vadd.f32 %v1360, %v1364
    %v1369 = vadd.f32 %v1361, %v1365
    %v1370 = vmul.f32 %v1366, %v59
    %v1371 = vmul.f32 %v1367, %v60
    %v1372 = vmul.f32 %v1368, %v61
    %v1373 = vmul.f32 %v1369, %v62
    %v1374 = vmax.f32 %v1370, %v1371
    %v1375 = vmax.f32 %v1372, %v1373
    %v1376 = vmax.f32 %v1374, %v1375
    %v1377 = vrot.slane %v1376, 4
    %v1378 = vmax.f32 %v1376, %v1377
    %v1379 = vrot.slane %v1378, 2
    %v1380 = vmax.f32 %v1378, %v1379
    %v1381 = vrot.slane %v1380, 1
    %v1382 = vmax.f32 %v1380, %v1381
    %v1383 = vmul.f32 %v1382, %v61
    %v1385 = vrot.slane %v1383, 2
    %v1387 = vmax.f32 %v1325, %v1385
    %v1388 = vlaneseq
    %v1389 = vshrl.u32 %v1388, 7
    %v1390 = vsub.s32 3, %v1389
    %v1391 = vrot.slane %v65, %v1390
    %v1392 = vsub.f32 %v63, %v1391
    %v1393 = vsub.f32 %v64, %v1391
    %v1394 = vsub.f32 %v65, %v1391
    %v1395 = vsub.f32 %v66, %v1391
    %v1396 = vlaneseq
    %v1397 = vshrl.u32 %v1396, 7
    %v1398 = vsub.s32 3, %v1397
    %v1399 = vrot.slane %v69, %v1398
    %v1400 = vsub.f32 %v67, %v1399
    %v1401 = vsub.f32 %v68, %v1399
    %v1402 = vsub.f32 %v69, %v1399
    %v1403 = vsub.f32 %v70, %v1399
    %v1404 = vlaneseq
    %v1405 = vshrl.u32 %v1404, 7
    %v1406 = vsub.s32 3, %v1405
    %v1407 = vrot.slane %v73, %v1406
    %v1408 = vsub.f32 %v71, %v1407
    %v1409 = vsub.f32 %v72, %v1407
    %v1410 = vsub.f32 %v73, %v1407
    %v1411 = vsub.f32 %v74, %v1407
    %v1412 = vmul.f32 %v1392, %v1392
    %v1413 = vmul.f32 %v1393, %v1393
    %v1414 = vmul.f32 %v1394, %v1394
    %v1415 = vmul.f32 %v1395, %v1395
    %v1416 = vmul.f32 %v1400, %v1400
    %v1417 = vmul.f32 %v1401, %v1401
    %v1418 = vmul.f32 %v1402, %v1402
    %v1419 = vmul.f32 %v1403, %v1403
    %v1420 = vadd.f32 %v1412, %v1416
    %v1421 = vadd.f32 %v1413, %v1417
    %v1422 = vadd.f32 %v1414, %v1418
    %v1423 = vadd.f32 %v1415, %v1419
    %v1424 = vmul.f32 %v1408, %v1408
    %v1425 = vmul.f32 %v1409, %v1409
    %v1426 = vmul.f32 %v1410, %v1410
    %v1427 = vmul.f32 %v1411, %v1411
    %v1428 = vadd.f32 %v1420, %v1424
    %v1429 = vadd.f32 %v1421, %v1425
    %v1430 = vadd.f32 %v1422, %v1426
    %v1431 = vadd.f32 %v1423, %v1427
    %v1432 = vmul.f32 %v1428, %v59
    %v1433 = vmul.f32 %v1429, %v60
    %v1434 = vmul.f32 %v1430, %v61
    %v1435 = vmul.f32 %v1431, %v62
    %v1436 = vmax.f32 %v1432, %v1433
    %v1437 = vmax.f32 %v1434, %v1435
    %v1438 = vmax.f32 %v1436, %v1437
    %v1439 = vrot.slane %v1438, 4
    %v1440 = vmax.f32 %v1438, %v1439
    %v1441 = vrot.slane %v1440, 2
    %v1442 = vmax.f32 %v1440, %v1441
    %v1443 = vrot.slane %v1442, 1
    %v1444 = vmax.f32 %v1442, %v1443
    %v1445 = vmul.f32 %v1444, %v61
    %v1447 = vrot.slane %v1445, 3
    %v1449 = vmax.f32 %v1387, %v1447
    %v1450 = vlaneseq
    %v1451 = vshrl.u32 %v1450, 7
    %v1452 = vsub.s32 4, %v1451
    %v1453 = vrot.slane %v65, %v1452
    %v1454 = vsub.f32 %v63, %v1453
    %v1455 = vsub.f32 %v64, %v1453
    %v1456 = vsub.f32 %v65, %v1453
    %v1457 = vsub.f32 %v66, %v1453
    %v1458 = vlaneseq
    %v1459 = vshrl.u32 %v1458, 7
    %v1460 = vsub.s32 4, %v1459
    %v1461 = vrot.slane %v69, %v1460
    %v1462 = vsub.f32 %v67, %v1461
    %v1463 = vsub.f32 %v68, %v1461
    %v1464 = vsub.f32 %v69, %v1461
    %v1465 = vsub.f32 %v70, %v1461
    %v1466 = vlaneseq
    %v1467 = vshrl.u32 %v1466, 7
    %v1468 = vsub.s32 4, %v1467
    %v1469 = vrot.slane %v73, %v1468
    %v1470 = vsub.f32 %v71, %v1469
    %v1471 = vsub.f32 %v72, %v1469
    %v1472 = vsub.f32 %v73, %v1469
    %v1473 = vsub.f32 %v74, %v1469
    %v1474 = vmul.f32 %v1454, %v1454
    %v1475 = vmul.f32 %v1455, %v1455
    %v1476 = vmul.f32 %v1456, %v1456
    %v1477 = vmul.f32 %v1457, %v1457
    %v1478 = vmul.f32 %v1462, %v1462
    %v1479 = vmul.f32 %v1463, %v1463
    %v1480 = vmul.f32 %v1464, %v1464
    %v1481 = vmul.f32 %v1465, %v1465
    %v1482 = vadd.f32 %v1474, %v1478
    %v1483 = vadd.f32 %v1475, %v1479
    %v1484 = vadd.f32 %v1476, %v1480
    %v1485 = vadd.f32 %v1477, %v1481
    %v1486 = vmul.f32 %v1470, %v1470
    %v1487 = vmul.f32 %v1471, %v1471
    %v1488 = vmul.f32 %v1472, %v1472
    %v1489 = vmul.f32 %v1473, %v1473
    %v1490 = vadd.f32 %v1482, %v1486
    %v1491 = vadd.f32 %v1483, %v1487
    %v1492 = vadd.f32 %v1484, %v1488
    %v1493 = vadd.f32 %v1485, %v1489
    %v1494 = vmul.f32 %v1490, %v59
    %v1495 = vmul.f32 %v1491, %v60
    %v1496 = vmul.f32 %v1492, %v61
    %v1497 = vmul.f32 %v1493, %v62
    %v1498 = vmax.f32 %v1494, %v1495
    %v1499 = vmax.f32 %v1496, %v1497
    %v1500 = vmax.f32 %v1498, %v1499
    %v1501 = vrot.slane %v1500, 4
    %v1502 = vmax.f32 %v1500, %v1501
    %v1503 = vrot.slane %v1502, 2
    %v1504 = vmax.f32 %v1502, %v1503
    %v1505 = vrot.slane %v1504, 1
    %v1506 = vmax.f32 %v1504, %v1505
    %v1507 = vmul.f32 %v1506, %v61
    %v1509 = vrot.slane %v1507, 4
    %v1511 = vmax.f32 %v1449, %v1509
    %v1512 = vlaneseq
    %v1513 = vshrl.u32 %v1512, 7
    %v1514 = vsub.s32 5, %v1513
    %v1515 = vrot.slane %v65, %v1514
    %v1516 = vsub.f32 %v63, %v1515
    %v1517 = vsub.f32 %v64, %v1515
    %v1518 = vsub.f32 %v65, %v1515
    %v1519 = vsub.f32 %v66, %v1515
    %v1520 = vlaneseq
    %v1521 = vshrl.u32 %v1520, 7
    %v1522 = vsub.s32 5, %v1521
    %v1523 = vrot.slane %v69, %v1522
    %v1524 = vsub.f32 %v67, %v1523
    %v1525 = vsub.f32 %v68, %v1523
    %v1526 = vsub.f32 %v69, %v1523
    %v1527 = vsub.f32 %v70, %v1523
    %v1528 = vlaneseq
    %v1529 = vshrl.u32 %v1528, 7
    %v1530 = vsub.s32 5, %v1529
    %v1531 = vrot.slane %v73, %v1530
    %v1532 = vsub.f32 %v71, %v1531
    %v1533 = vsub.f32 %v72, %v1531
    %v1534 = vsub.f32 %v73, %v1531
    %v1535 = vsub.f32 %v74, %v1531
    %v1536 = vmul.f32 %v1516, %v1516
    %v1537 = vmul.f32 %v1517, %v1517
    %v1538 = vmul.f32 %v1518, %v1518
    %v1539 = vmul.f32 %v1519, %v1519
    %v1540 = vmul.f32 %v1524, %v1524
    %v1541 = vmul.f32 %v1525, %v1525
    %v1542 = vmul.f32 %v1526, %v1526
    %v1543 = vmul.f32 %v1527, %v1527
    %v1544 = vadd.f32 %v1536, %v1540
    %v1545 = vadd.f32 %v1537, %v1541
    %v1546 = vadd.f32 %v1538, %v1542
    %v1547 = vadd.f32 %v1539, %v1543
    %v1548 = vmul.f32 %v1532, %v1532
    %v1549 = vmul.f32 %v1533, %v1533
    %v1550 = vmul.f32 %v1534, %v1534
    %v1551 = vmul.f32 %v1535, %v1535
    %v1552 = vadd.f32 %v1544, %v1548
    %v1553 = vadd.f32 %v1545, %v1549
    %v1554 = vadd.f32 %v1546, %v1550
    %v1555 = vadd.f32 %v1547, %v1551
    %v1556 = vmul.f32 %v1552, %v59
    %v1557 = vmul.f32 %v1553, %v60
    %v1558 = vmul.f32 %v1554, %v61
    %v1559 = vmul.f32 %v1555, %v62
    %v1560 = vmax.f32 %v1556, %v1557
    %v1561 = vmax.f32 %v1558, %v1559
    %v1562 = vmax.f32 %v1560, %v1561
    %v1563 = vrot.slane %v1562, 4
    %v1564 = vmax.f32 %v1562, %v1563
    %v1565 = vrot.slane %v1564, 2
    %v1566 = vmax.f32 %v1564, %v1565
    %v1567 = vrot.slane %v1566, 1
    %v1568 = vmax.f32 %v1566, %v1567
    %v1569 = vmul.f32 %v1568, %v61
    %v1571 = vrot.slane %v1569, 5
    %v1573 = vmax.f32 %v1511, %v1571
    %v1574 = vlaneseq
    %v1575 = vshrl.u32 %v1574, 7
    %v1576 = vsub.s32 6, %v1575
    %v1577 = vrot.slane %v65, %v1576
    %v1578 = vsub.f32 %v63, %v1577
    %v1579 = vsub.f32 %v64, %v1577
    %v1580 = vsub.f32 %v65, %v1577
    %v1581 = vsub.f32 %v66, %v1577
    %v1582 = vlaneseq
    %v1583 = vshrl.u32 %v1582, 7
    %v1584 = vsub.s32 6, %v1583
    %v1585 = vrot.slane %v69, %v1584
    %v1586 = vsub.f32 %v67, %v1585
    %v1587 = vsub.f32 %v68, %v1585
    %v1588 = vsub.f32 %v69, %v1585
    %v1589 = vsub.f32 %v70, %v1585
    %v1590 = vlaneseq
    %v1591 = vshrl.u32 %v1590, 7
    %v1592 = vsub.s32 6, %v1591
    %v1593 = vrot.slane %v73, %v1592
    %v1594 = vsub.f32 %v71, %v1593
    %v1595 = vsub.f32 %v72, %v1593
    %v1596 = vsub.f32 %v73, %v1593
    %v1597 = vsub.f32 %v74, %v1593
    %v1598 = vmul.f32 %v1578, %v1578
    %v1599 = vmul.f32 %v1579, %v1579
    %v1600 = vmul.f32 %v1580, %v1580
    %v1601 = vmul.f32 %v1581, %v1581
    %v1602 = vmul.f32 %v1586, %v1586
    %v1603 = vmul.f32 %v1587, %v1587
    %v1604 = vmul.f32 %v1588, %v1588
    %v1605 = vmul.f32 %v1589, %v1589
    %v1606 = vadd.f32 %v1598, %v1602
    %v1607 = vadd.f32 %v1599, %v1603
    %v1608 = vadd.f32 %v1600, %v1604
    %v1609 = vadd.f32 %v1601, %v1605
    %v1610 = vmul.f32 %v1594, %v1594
    %v1611 = vmul.f32 %v1595, %v1595
    %v1612 = vmul.f32 %v1596, %v1596
    %v1613 = vmul.f32 %v1597, %v1597
    %v1614 = vadd.f32 %v1606, %v1610
    %v1615 = vadd.f32 %v1607, %v1611
    %v1616 = vadd.f32 %v1608, %v1612
    %v1617 = vadd.f32 %v1609, %v1613
    %v1618 = vmul.f32 %v1614, %v59
    %v1619 = vmul.f32 %v1615, %v60
    %v1620 = vmul.f32 %v1616, %v61
    %v1621 = vmul.f32 %v1617, %v62
    %v1622 = vmax.f32 %v1618, %v1619
    %v1623 = vmax.f32 %v1620, %v1621
    %v1624 = vmax.f32 %v1622, %v1623
    %v1625 = vrot.slane %v1624, 4
    %v1626 = vmax.f32 %v1624, %v1625
    %v1627 = vrot.slane %v1626, 2
    %v1628 = vmax.f32 %v1626, %v1627
    %v1629 = vrot.slane %v1628, 1
    %v1630 = vmax.f32 %v1628, %v1629
    %v1631 = vmul.f32 %v1630, %v61
    %v1633 = vrot.slane %v1631, 6
    %v1635 = vmax.f32 %v1573, %v1633
    %v1636 = vlaneseq
    %v1637 = vshrl.u32 %v1636, 7
    %v1638 = vsub.s32 7, %v1637
    %v1639 = vrot.slane %v65, %v1638
    %v1640 = vsub.f32 %v63, %v1639
    %v1641 = vsub.f32 %v64, %v1639
    %v1642 = vsub.f32 %v65, %v1639
    %v1643 = vsub.f32 %v66, %v1639
    %v1644 = vlaneseq
    %v1645 = vshrl.u32 %v1644, 7
    %v1646 = vsub.s32 7, %v1645
    %v1647 = vrot.slane %v69, %v1646
    %v1648 = vsub.f32 %v67, %v1647
    %v1649 = vsub.f32 %v68, %v1647
    %v1650 = vsub.f32 %v69, %v1647
    %v1651 = vsub.f32 %v70, %v1647
    %v1652 = vlaneseq
    %v1653 = vshrl.u32 %v1652, 7
    %v1654 = vsub.s32 7, %v1653
    %v1655 = vrot.slane %v73, %v1654
    %v1656 = vsub.f32 %v71, %v1655
    %v1657 = vsub.f32 %v72, %v1655
    %v1658 = vsub.f32 %v73, %v1655
    %v1659 = vsub.f32 %v74, %v1655
    %v1660 = vmul.f32 %v1640, %v1640
    %v1661 = vmul.f32 %v1641, %v1641
    %v1662 = vmul.f32 %v1642, %v1642
    %v1663 = vmul.f32 %v1643, %v1643
    %v1664 = vmul.f32 %v1648, %v1648
    %v1665 = vmul.f32 %v1649, %v1649
    %v1666 = vmul.f32 %v1650, %v1650
    %v1667 = vmul.f32 %v1651, %v1651
    %v1668 = vadd.f32 %v1660, %v1664
    %v1669 = vadd.f32 %v1661, %v1665
    %v1670 = vadd.f32 %v1662, %v1666
    %v1671 = vadd.f32 %v1663, %v1667
    %v1672 = vmul.f32 %v1656, %v1656
    %v1673 = vmul.f32 %v1657, %v1657
    %v1674 = vmul.f32 %v1658, %v1658
    %v1675 = vmul.f32 %v1659, %v1659
    %v1676 = vadd.f32 %v1668, %v1672
    %v1677 = vadd.f32 %v1669, %v1673
    %v1678 = vadd.f32 %v1670, %v1674
    %v1679 = vadd.f32 %v1671, %v1675
    %v1680 = vmul.f32 %v1676, %v59
    %v1681 = vmul.f32 %v1677, %v60
    %v1682 = vmul.f32 %v1678, %v61
    %v1683 = vmul.f32 %v1679, %v62
    %v1684 = vmax.f32 %v1680, %v1681
    %v1685 = vmax.f32 %v1682, %v1683
    %v1686 = vmax.f32 %v1684, %v1685
    %v1687 = vrot.slane %v1686, 4
    %v1688 = vmax.f32 %v1686, %v1687
    %v1689 = vrot.slane %v1688, 2
    %v1690 = vmax.f32 %v1688, %v1689
    %v1691 = vrot.slane %v1690, 1
    %v1692 = vmax.f32 %v1690, %v1691
    %v1693 = vmul.f32 %v1692, %v61
    %v1695 = vrot.slane %v1693, 7
    %v1697 = vmax.f32 %v1635, %v1695
    %v1698 = vlaneseq
    %v1699 = vshrl.u32 %v1698, 7
    %v1700 = vsub.s32 0, %v1699
    %v1701 = vrot.slane %v66, %v1700
    %v1702 = vsub.f32 %v63, %v1701
    %v1703 = vsub.f32 %v64, %v1701
    %v1704 = vsub.f32 %v65, %v1701
    %v1705 = vsub.f32 %v66, %v1701
    %v1706 = vlaneseq
    %v1707 = vshrl.u32 %v1706, 7
    %v1708 = vsub.s32 0, %v1707
    %v1709 = vrot.slane %v70, %v1708
    %v1710 = vsub.f32 %v67, %v1709
    %v1711 = vsub.f32 %v68, %v1709
    %v1712 = vsub.f32 %v69, %v1709
    %v1713 = vsub.f32 %v70, %v1709
    %v1714 = vlaneseq
    %v1715 = vshrl.u32 %v1714, 7
    %v1716 = vsub.s32 0, %v1715
    %v1717 = vrot.slane %v74, %v1716
    %v1718 = vsub.f32 %v71, %v1717
    %v1719 = vsub.f32 %v72, %v1717
    %v1720 = vsub.f32 %v73, %v1717
    %v1721 = vsub.f32 %v74, %v1717
    %v1722 = vmul.f32 %v1702, %v1702
    %v1723 = vmul.f32 %v1703, %v1703
    %v1724 = vmul.f32 %v1704, %v1704
    %v1725 = vmul.f32 %v1705, %v1705
    %v1726 = vmul.f32 %v1710, %v1710
    %v1727 = vmul.f32 %v1711, %v1711
    %v1728 = vmul.f32 %v1712, %v1712
    %v1729 = vmul.f32 %v1713, %v1713
    %v1730 = vadd.f32 %v1722, %v1726
    %v1731 = vadd.f32 %v1723, %v1727
    %v1732 = vadd.f32 %v1724, %v1728
    %v1733 = vadd.f32 %v1725, %v1729
    %v1734 = vmul.f32 %v1718, %v1718
    %v1735 = vmul.f32 %v1719, %v1719
    %v1736 = vmul.f32 %v1720, %v1720
    %v1737 = vmul.f32 %v1721, %v1721
    %v1738 = vadd.f32 %v1730, %v1734
    %v1739 = vadd.f32 %v1731, %v1735
    %v1740 = vadd.f32 %v1732, %v1736
    %v1741 = vadd.f32 %v1733, %v1737
    %v1742 = vmul.f32 %v1738, %v59
    %v1743 = vmul.f32 %v1739, %v60
    %v1744 = vmul.f32 %v1740, %v61
    %v1745 = vmul.f32 %v1741, %v62
    %v1746 = vmax.f32 %v1742, %v1743
    %v1747 = vmax.f32 %v1744, %v1745
    %v1748 = vmax.f32 %v1746, %v1747
    %v1749 = vrot.slane %v1748, 4
    %v1750 = vmax.f32 %v1748, %v1749
    %v1751 = vrot.slane %v1750, 2
    %v1752 = vmax.f32 %v1750, %v1751
    %v1753 = vrot.slane %v1752, 1
    %v1754 = vmax.f32 %v1752, %v1753
    %v1755 = vmul.f32 %v1754, %v62
    %v1756 = vmax.f32 %v1697, %v1755
    %v1757 = vlaneseq
    %v1758 = vshrl.u32 %v1757, 7
    %v1759 = vsub.s32 1, %v1758
    %v1760 = vrot.slane %v66, %v1759
    %v1761 = vsub.f32 %v63, %v1760
    %v1762 = vsub.f32 %v64, %v1760
    %v1763 = vsub.f32 %v65, %v1760
    %v1764 = vsub.f32 %v66, %v1760
    %v1765 = vlaneseq
    %v1766 = vshrl.u32 %v1765, 7
    %v1767 = vsub.s32 1, %v1766
    %v1768 = vrot.slane %v70, %v1767
    %v1769 = vsub.f32 %v67, %v1768
    %v1770 = vsub.f32 %v68, %v1768
    %v1771 = vsub.f32 %v69, %v1768
    %v1772 = vsub.f32 %v70, %v1768
    %v1773 = vlaneseq
    %v1774 = vshrl.u32 %v1773, 7
    %v1775 = vsub.s32 1, %v1774
    %v1776 = vrot.slane %v74, %v1775
    %v1777 = vsub.f32 %v71, %v1776
    %v1778 = vsub.f32 %v72, %v1776
    %v1779 = vsub.f32 %v73, %v1776
    %v1780 = vsub.f32 %v74, %v1776
    %v1781 = vmul.f32 %v1761, %v1761
    %v1782 = vmul.f32 %v1762, %v1762
    %v1783 = vmul.f32 %v1763, %v1763
    %v1784 = vmul.f32 %v1764, %v1764
    %v1785 = vmul.f32 %v1769, %v1769
    %v1786 = vmul.f32 %v1770, %v1770
    %v1787 = vmul.f32 %v1771, %v1771
    %v1788 = vmul.f32 %v1772, %v1772
    %v1789 = vadd.f32 %v1781, %v1785
    %v1790 = vadd.f32 %v1782, %v1786
    %v1791 = vadd.f32 %v1783, %v1787
    %v1792 = vadd.f32 %v1784, %v1788
    %v1793 = vmul.f32 %v1777, %v1777
    %v1794 = vmul.f32 %v1778, %v1778
    %v1795 = vmul.f32 %v1779, %v1779
    %v1796 = vmul.f32 %v1780, %v1780
    %v1797 = vadd.f32 %v1789, %v1793
    %v1798 = vadd.f32 %v1790, %v1794
    %v1799 = vadd.f32 %v1791, %v1795
    %v1800 = vadd.f32 %v1792, %v1796
    %v1801 = vmul.f32 %v1797, %v59
    %v1802 = vmul.f32 %v1798, %v60
    %v1803 = vmul.f32 %v1799, %v61
    %v1804 = vmul.f32 %v1800, %v62
    %v1805 = vmax.f32 %v1801, %v1802
    %v1806 = vmax.f32 %v1803, %v1804
    %v1807 = vmax.f32 %v1805, %v1806
    %v1808 = vrot.slane %v1807, 4
    %v1809 = vmax.f32 %v1807, %v1808
    %v1810 = vrot.slane %v1809, 2
    %v1811 = vmax.f32 %v1809, %v1810
    %v1812 = vrot.slane %v1811, 1
    %v1813 = vmax.f32 %v1811, %v1812
    %v1814 = vmul.f32 %v1813, %v62
    %v1816 = vrot.slane %v1814, 1
    %v1818 = vmax.f32 %v1756, %v1816
    %v1819 = vlaneseq
    %v1820 = vshrl.u32 %v1819, 7
    %v1821 = vsub.s32 2, %v1820
    %v1822 = vrot.slane %v66, %v1821
    %v1823 = vsub.f32 %v63, %v1822
    %v1824 = vsub.f32 %v64, %v1822
    %v1825 = vsub.f32 %v65, %v1822
    %v1826 = vsub.f32 %v66, %v1822
    %v1827 = vlaneseq
    %v1828 = vshrl.u32 %v1827, 7
    %v1829 = vsub.s32 2, %v1828
    %v1830 = vrot.slane %v70, %v1829
    %v1831 = vsub.f32 %v67, %v1830
    %v1832 = vsub.f32 %v68, %v1830
    %v1833 = vsub.f32 %v69, %v1830
    %v1834 = vsub.f32 %v70, %v1830
    %v1835 = vlaneseq
    %v1836 = vshrl.u32 %v1835, 7
    %v1837 = vsub.s32 2, %v1836
    %v1838 = vrot.slane %v74, %v1837
    %v1839 = vsub.f32 %v71, %v1838
    %v1840 = vsub.f32 %v72, %v1838
    %v1841 = vsub.f32 %v73, %v1838
    %v1842 = vsub.f32 %v74, %v1838
    %v1843 = vmul.f32 %v1823, %v1823
    %v1844 = vmul.f32 %v1824, %v1824
    %v1845 = vmul.f32 %v1825, %v1825
    %v1846 = vmul.f32 %v1826, %v1826
    %v1847 = vmul.f32 %v1831, %v1831
    %v1848 = vmul.f32 %v1832, %v1832
    %v1849 = vmul.f32 %v1833, %v1833
    %v1850 = vmul.f32 %v1834, %v1834
    %v1851 = vadd.f32 %v1843, %v1847
    %v1852 = vadd.f32 %v1844, %v1848
    %v1853 = vadd.f32 %v1845, %v1849
    %v1854 = vadd.f32 %v1846, %v1850
    %v1855 = vmul.f32 %v1839, %v1839
    %v1856 = vmul.f32 %v1840, %v1840
    %v1857 = vmul.f32 %v1841, %v1841
    %v1858 = vmul.f32 %v1842, %v1842
    %v1859 = vadd.f32 %v1851, %v1855
    %v1860 = vadd.f32 %v1852, %v1856
    %v1861 = vadd.f32 %v1853, %v1857
    %v1862 = vadd.f32 %v1854, %v1858
    %v1863 = vmul.f32 %v1859, %v59
    %v1864 = vmul.f32 %v1860, %v60
    %v1865 = vmul.f32 %v1861, %v61
    %v1866 = vmul.f32 %v1862, %v62
    %v1867 = vmax.f32 %v1863, %v1864
    %v1868 = vmax.f32 %v1865, %v1866
    %v1869 = vmax.f32 %v1867, %v1868
    %v1870 = vrot.slane %v1869, 4
    %v1871 = vmax.f32 %v1869, %v1870
    %v1872 = vrot.slane %v1871, 2
    %v1873 = vmax.f32 %v1871, %v1872
    %v1874 = vrot.slane %v1873, 1
    %v1875 = vmax.f32 %v1873, %v1874
    %v1876 = vmul.f32 %v1875, %v62
    %v1878 = vrot.slane %v1876, 2
    %v1880 = vmax.f32 %v1818, %v1878
    %v1881 = vlaneseq
    %v1882 = vshrl.u32 %v1881, 7
    %v1883 = vsub.s32 3, %v1882
    %v1884 = vrot.slane %v66, %v1883
    %v1885 = vsub.f32 %v63, %v1884
    %v1886 = vsub.f32 %v64, %v1884
    %v1887 = vsub.f32 %v65, %v1884
    %v1888 = vsub.f32 %v66, %v1884
    %v1889 = vlaneseq
    %v1890 = vshrl.u32 %v1889, 7
    %v1891 = vsub.s32 3, %v1890
    %v1892 = vrot.slane %v70, %v1891
    %v1893 = vsub.f32 %v67, %v1892
    %v1894 = vsub.f32 %v68, %v1892
    %v1895 = vsub.f32 %v69, %v1892
    %v1896 = vsub.f32 %v70, %v1892
    %v1897 = vlaneseq
    %v1898 = vshrl.u32 %v1897, 7
    %v1899 = vsub.s32 3, %v1898
    %v1900 = vrot.slane %v74, %v1899
    %v1901 = vsub.f32 %v71, %v1900
    %v1902 = vsub.f32 %v72, %v1900
    %v1903 = vsub.f32 %v73, %v1900
    %v1904 = vsub.f32 %v74, %v1900
    %v1905 = vmul.f32 %v1885, %v1885
    %v1906 = vmul.f32 %v1886, %v1886
    %v1907 = vmul.f32 %v1887, %v1887
    %v1908 = vmul.f32 %v1888, %v1888
    %v1909 = vmul.f32 %v1893, %v1893
    %v1910 = vmul.f32 %v1894, %v1894
    %v1911 = vmul.f32 %v1895, %v1895
    %v1912 = vmul.f32 %v1896, %v1896
    %v1913 = vadd.f32 %v1905, %v1909
    %v1914 = vadd.f32 %v1906, %v1910
    %v1915 = vadd.f32 %v1907, %v1911
    %v1916 = vadd.f32 %v1908, %v1912
    %v1917 = vmul.f32 %v1901, %v1901
    %v1918 = vmul.f32 %v1902, %v1902
    %v1919 = vmul.f32 %v1903, %v1903
    %v1920 = vmul.f32 %v1904, %v1904
    %v1921 = vadd.f32 %v1913, %v1917
    %v1922 = vadd.f32 %v1914, %v1918
    %v1923 = vadd.f32 %v1915, %v1919
    %v1924 = vadd.f32 %v1916, %v1920
    %v1925 = vmul.f32 %v1921, %v59
    %v1926 = vmul.f32 %v1922, %v60
    %v1927 = vmul.f32 %v1923, %v61
    %v1928 = vmul.f32 %v1924, %v62
    %v1929 = vmax.f32 %v1925, %v1926
    %v1930 = vmax.f32 %v1927, %v1928
    %v1931 = vmax.f32 %v1929, %v1930
    %v1932 = vrot.slane %v1931, 4
    %v1933 = vmax.f32 %v1931, %v1932
    %v1934 = vrot.slane %v1933, 2
    %v1935 = vmax.f32 %v1933, %v1934
    %v1936 = vrot.slane %v1935, 1
    %v1937 = vmax.f32 %v1935, %v1936
    %v1938 = vmul.f32 %v1937, %v62
    %v1940 = vrot.slane %v1938, 3
    %v1942 = vmax.f32 %v1880, %v1940
    %v1943 = vlaneseq
    %v1944 = vshrl.u32 %v1943, 7
    %v1945 = vsub.s32 4, %v1944
    %v1946 = vrot.slane %v66, %v1945
    %v1947 = vsub.f32 %v63, %v1946
    %v1948 = vsub.f32 %v64, %v1946
    %v1949 = vsub.f32 %v65, %v1946
    %v1950 = vsub.f32 %v66, %v1946
    %v1951 = vlaneseq
    %v1952 = vshrl.u32 %v1951, 7
    %v1953 = vsub.s32 4, %v1952
    %v1954 = vrot.slane %v70, %v1953
    %v1955 = vsub.f32 %v67, %v1954
    %v1956 = vsub.f32 %v68, %v1954
    %v1957 = vsub.f32 %v69, %v1954
    %v1958 = vsub.f32 %v70, %v1954
    %v1959 = vlaneseq
    %v1960 = vshrl.u32 %v1959, 7
    %v1961 = vsub.s32 4, %v1960
    %v1962 = vrot.slane %v74, %v1961
    %v1963 = vsub.f32 %v71, %v1962
    %v1964 = vsub.f32 %v72, %v1962
    %v1965 = vsub.f32 %v73, %v1962
    %v1966 = vsub.f32 %v74, %v1962
    %v1967 = vmul.f32 %v1947, %v1947
    %v1968 = vmul.f32 %v1948, %v1948
    %v1969 = vmul.f32 %v1949, %v1949
    %v1970 = vmul.f32 %v1950, %v1950
    %v1971 = vmul.f32 %v1955, %v1955
    %v1972 = vmul.f32 %v1956, %v1956
    %v1973 = vmul.f32 %v1957, %v1957
    %v1974 = vmul.f32 %v1958, %v1958
    %v1975 = vadd.f32 %v1967, %v1971
    %v1976 = vadd.f32 %v1968, %v1972
    %v1977 = vadd.f32 %v1969, %v1973
    %v1978 = vadd.f32 %v1970, %v1974
    %v1979 = vmul.f32 %v1963, %v1963
    %v1980 = vmul.f32 %v1964, %v1964
    %v1981 = vmul.f32 %v1965, %v1965
    %v1982 = vmul.f32 %v1966, %v1966
    %v1983 = vadd.f32 %v1975, %v1979
    %v1984 = vadd.f32 %v1976, %v1980
    %v1985 = vadd.f32 %v1977, %v1981
    %v1986 = vadd.f32 %v1978, %v1982
    %v1987 = vmul.f32 %v1983, %v59
    %v1988 = vmul.f32 %v1984, %v60
    %v1989 = vmul.f32 %v1985, %v61
    %v1990 = vmul.f32 %v1986, %v62
    %v1991 = vmax.f32 %v1987, %v1988
    %v1992 = vmax.f32 %v1989, %v1990
    %v1993 = vmax.f32 %v1991, %v1992
    %v1994 = vrot.slane %v1993, 4
    %v1995 = vmax.f32 %v1993, %v1994
    %v1996 = vrot.slane %v1995, 2
    %v1997 = vmax.f32 %v1995, %v1996
    %v1998 = vrot.slane %v1997, 1
    %v1999 = vmax.f32 %v1997, %v1998
    %v2000 = vmul.f32 %v1999, %v62
    %v2002 = vrot.slane %v2000, 4
    %v2004 = vmax.f32 %v1942, %v2002
    %v2005 = vlaneseq
    %v2006 = vshrl.u32 %v2005, 7
    %v2007 = vsub.s32 5, %v2006
    %v2008 = vrot.slane %v66, %v2007
    %v2009 = vsub.f32 %v63, %v2008
    %v2010 = vsub.f32 %v64, %v2008
    %v2011 = vsub.f32 %v65, %v2008
    %v2012 = vsub.f32 %v66, %v2008
    %v2013 = vlaneseq
    %v2014 = vshrl.u32 %v2013, 7
    %v2015 = vsub.s32 5, %v2014
    %v2016 = vrot.slane %v70, %v2015
    %v2017 = vsub.f32 %v67, %v2016
    %v2018 = vsub.f32 %v68, %v2016
    %v2019 = vsub.f32 %v69, %v2016
    %v2020 = vsub.f32 %v70, %v2016
    %v2021 = vlaneseq
    %v2022 = vshrl.u32 %v2021, 7
    %v2023 = vsub.s32 5, %v2022
    %v2024 = vrot.slane %v74, %v2023
    %v2025 = vsub.f32 %v71, %v2024
    %v2026 = vsub.f32 %v72, %v2024
    %v2027 = vsub.f32 %v73, %v2024
    %v2028 = vsub.f32 %v74, %v2024
    %v2029 = vmul.f32 %v2009, %v2009
    %v2030 = vmul.f32 %v2010, %v2010
    %v2031 = vmul.f32 %v2011, %v2011
    %v2032 = vmul.f32 %v2012, %v2012
    %v2033 = vmul.f32 %v2017, %v2017
    %v2034 = vmul.f32 %v2018, %v2018
    %v2035 = vmul.f32 %v2019, %v2019
    %v2036 = vmul.f32 %v2020, %v2020
    %v2037 = vadd.f32 %v2029, %v2033
    %v2038 = vadd.f32 %v2030, %v2034
    %v2039 = vadd.f32 %v2031, %v2035
    %v2040 = vadd.f32 %v2032, %v2036
    %v2041 = vmul.f32 %v2025, %v2025
    %v2042 = vmul.f32 %v2026, %v2026
    %v2043 = vmul.f32 %v2027, %v2027
    %v2044 = vmul.f32 %v2028, %v2028
    %v2045 = vadd.f32 %v2037, %v2041
    %v2046 = vadd.f32 %v2038, %v2042
    %v2047 = vadd.f32 %v2039, %v2043
    %v2048 = vadd.f32 %v2040, %v2044
    %v2049 = vmul.f32 %v2045, %v59
    %v2050 = vmul.f32 %v2046, %v60
    %v2051 = vmul.f32 %v2047, %v61
    %v2052 = vmul.f32 %v2048, %v62
    %v2053 = vmax.f32 %v2049, %v2050
    %v2054 = vmax.f32 %v2051, %v2052
    %v2055 = vmax.f32 %v2053, %v2054
    %v2056 = vrot.slane %v2055, 4
    %v2057 = vmax.f32 %v2055, %v2056
    %v2058 = vrot.slane %v2057, 2
    %v2059 = vmax.f32 %v2057, %v2058
    %v2060 = vrot.slane %v2059, 1
    %v2061 = vmax.f32 %v2059, %v2060
    %v2062 = vmul.f32 %v2061, %v62
    %v2064 = vrot.slane %v2062, 5
    %v2066 = vmax.f32 %v2004, %v2064
    %v2067 = vlaneseq
    %v2068 = vshrl.u32 %v2067, 7
    %v2069 = vsub.s32 6, %v2068
    %v2070 = vrot.slane %v66, %v2069
    %v2071 = vsub.f32 %v63, %v2070
    %v2072 = vsub.f32 %v64, %v2070
    %v2073 = vsub.f32 %v65, %v2070
    %v2074 = vsub.f32 %v66, %v2070
    %v2075 = vlaneseq
    %v2076 = vshrl.u32 %v2075, 7
    %v2077 = vsub.s32 6, %v2076
    %v2078 = vrot.slane %v70, %v2077
    %v2079 = vsub.f32 %v67, %v2078
    %v2080 = vsub.f32 %v68, %v2078
    %v2081 = vsub.f32 %v69, %v2078
    %v2082 = vsub.f32 %v70, %v2078
    %v2083 = vlaneseq
    %v2084 = vshrl.u32 %v2083, 7
    %v2085 = vsub.s32 6, %v2084
    %v2086 = vrot.slane %v74, %v2085
    %v2087 = vsub.f32 %v71, %v2086
    %v2088 = vsub.f32 %v72, %v2086
    %v2089 = vsub.f32 %v73, %v2086
    %v2090 = vsub.f32 %v74, %v2086
    %v2091 = vmul.f32 %v2071, %v2071
    %v2092 = vmul.f32 %v2072, %v2072
    %v2093 = vmul.f32 %v2073, %v2073
    %v2094 = vmul.f32 %v2074, %v2074
    %v2095 = vmul.f32 %v2079, %v2079
    %v2096 = vmul.f32 %v2080, %v2080
    %v2097 = vmul.f32 %v2081, %v2081
    %v2098 = vmul.f32 %v2082, %v2082
    %v2099 = vadd.f32 %v2091, %v2095
    %v2100 = vadd.f32 %v2092, %v2096
    %v2101 = vadd.f32 %v2093, %v2097
    %v2102 = vadd.f32 %v2094, %v2098
    %v2103 = vmul.f32 %v2087, %v2087
    %v2104 = vmul.f32 %v2088, %v2088
    %v2105 = vmul.f32 %v2089, %v2089
    %v2106 = vmul.f32 %v2090, %v2090
    %v2107 = vadd.f32 %v2099, %v2103
    %v2108 = vadd.f32 %v2100, %v2104
    %v2109 = vadd.f32 %v2101, %v2105
    %v2110 = vadd.f32 %v2102, %v2106
    %v2111 = vmul.f32 %v2107, %v59
    %v2112 = vmul.f32 %v2108, %v60
    %v2113 = vmul.f32 %v2109, %v61
    %v2114 = vmul.f32 %v2110, %v62
    %v2115 = vmax.f32 %v2111, %v2112
    %v2116 = vmax.f32 %v2113, %v2114
    %v2117 = vmax.f32 %v2115, %v2116
    %v2118 = vrot.slane %v2117, 4
    %v2119 = vmax.f32 %v2117, %v2118
    %v2120 = vrot.slane %v2119, 2
    %v2121 = vmax.f32 %v2119, %v2120
    %v2122 = vrot.slane %v2121, 1
    %v2123 = vmax.f32 %v2121, %v2122
    %v2124 = vmul.f32 %v2123, %v62
    %v2126 = vrot.slane %v2124, 6
    %v2128 = vmax.f32 %v2066, %v2126
    %v2129 = vlaneseq
    %v2130 = vshrl.u32 %v2129, 7
    %v2131 = vsub.s32 7, %v2130
    %v2132 = vrot.slane %v66, %v2131
    %v2133 = vsub.f32 %v63, %v2132
    %v2134 = vsub.f32 %v64, %v2132
    %v2135 = vsub.f32 %v65, %v2132
    %v2136 = vsub.f32 %v66, %v2132
    %v2137 = vlaneseq
    %v2138 = vshrl.u32 %v2137, 7
    %v2139 = vsub.s32 7, %v2138
    %v2140 = vrot.slane %v70, %v2139
    %v2141 = vsub.f32 %v67, %v2140
    %v2142 = vsub.f32 %v68, %v2140
    %v2143 = vsub.f32 %v69, %v2140
    %v2144 = vsub.f32 %v70, %v2140
    %v2145 = vlaneseq
    %v2146 = vshrl.u32 %v2145, 7
    %v2147 = vsub.s32 7, %v2146
    %v2148 = vrot.slane %v74, %v2147
    %v2149 = vsub.f32 %v71, %v2148
    %v2150 = vsub.f32 %v72, %v2148
    %v2151 = vsub.f32 %v73, %v2148
    %v2152 = vsub.f32 %v74, %v2148
    %v2153 = vmul.f32 %v2133, %v2133
    %v2154 = vmul.f32 %v2134, %v2134
    %v2155 = vmul.f32 %v2135, %v2135
    %v2156 = vmul.f32 %v2136, %v2136
    %v2157 = vmul.f32 %v2141, %v2141
    %v2158 = vmul.f32 %v2142, %v2142
    %v2159 = vmul.f32 %v2143, %v2143
    %v2160 = vmul.f32 %v2144, %v2144
    %v2161 = vadd.f32 %v2153, %v2157
    %v2162 = vadd.f32 %v2154, %v2158
    %v2163 = vadd.f32 %v2155, %v2159
    %v2164 = vadd.f32 %v2156, %v2160
    %v2165 = vmul.f32 %v2149, %v2149
    %v2166 = vmul.f32 %v2150, %v2150
    %v2167 = vmul.f32 %v2151, %v2151
    %v2168 = vmul.f32 %v2152, %v2152
    %v2169 = vadd.f32 %v2161, %v2165
    %v2170 = vadd.f32 %v2162, %v2166
    %v2171 = vadd.f32 %v2163, %v2167
    %v2172 = vadd.f32 %v2164, %v2168
    %v2173 = vmul.f32 %v2169, %v59
    %v2174 = vmul.f32 %v2170, %v60
    %v2175 = vmul.f32 %v2171, %v61
    %v2176 = vmul.f32 %v2172, %v62
    %v2177 = vmax.f32 %v2173, %v2174
    %v2178 = vmax.f32 %v2175, %v2176
    %v2179 = vmax.f32 %v2177, %v2178
    %v2180 = vrot.slane %v2179, 4
    %v2181 = vmax.f32 %v2179, %v2180
    %v2182 = vrot.slane %v2181, 2
    %v2183 = vmax.f32 %v2181, %v2182
    %v2184 = vrot.slane %v2183, 1
    %v2185 = vmax.f32 %v2183, %v2184
    %v2186 = vmul.f32 %v2185, %v62
    %v2188 = vrot.slane %v2186, 7
    %v2190 = vmax.f32 %v2128, %v2188
    %v2191 = vrsqrt.pop %v2190
    %v2192 = vmul.f32 %v2190, %v2191
    %vm2193 = vcmp.eq.f32.partialorder %v2190, inf
    %v2194 = vsel %vm2193, %v2190, %v2192
    %vm2195 = vcmp.eq.f32.partialorder %v2190, 0.0
    %v2196 = vand.u32 %v2190, 2147483648
    %v2197 = vsel %vm2195, %v2196, %v2194
    %vm2198 = vcmp.eq.s32.totalorder %v38, 1
    %v2199 = vsel %vm2198, 0.0, 1.0
    %2200 = vst [vmem:[#allocation5] sm:$0x1] %v174
    %v2202 = vlaneseq
    %v2203 = vshrl.u32 %v2202, 7
    %v2204 = vsub.s32 0, %v2203
    %v2205 = vrot.slane %v2199, %v2204
    %v2207 = vmul.f32 %v175, %v2205
    %v2208 = vmul.f32 %v176, %v2205
    %v2211 = vrot.slane %v2208, 7
    %vm2212 = vcmask 1041409
    %v2213 = vsel %vm2212, %v2211, %v2207
    %2215 = vst [vmem:[#allocation5 + $0x1] sm:$0x3] %v2213
    %v2216 = vmul.f32 %v216, %v2205
    %v2217 = vmul.f32 %v217, %v2205
    %v2218 = vmul.f32 %v218, %v2205
    %v2222 = vrot.slane %v2217, 7
    %v2223 = vsel %vm2212, %v2222, %v2216
    %v2224 = vrot.slane %v2218, 6
    %vm2225 = vcmask 1042434
    %v2226 = vsel %vm2225, %v2224, %v2223
    %2228 = vst [vmem:[#allocation5 + $0x3] sm:$0x7] %v2226
    %v2229 = vmul.f32 %v2197, %v2199
    %2230 = vst [vmem:[#allocation5 + $0x6] sm:$0x1] %v2229
    // Predicated region
    $region14: #{tpu_custom_call.1} parent=1 // pred_check
      _
    $region15: #{tpu_custom_call.1} parent=1 // pred_check_branch
      %2232 = sbr.rel (0) target = $region17
    $region16: #{tpu_custom_call.1} parent=1 // pred_region
      %s2234 = ssub.s32 128, 128
      %2235 = vsyncadd [#allocation4], %s2234
      %s2237 = sshll.u32 [#allocation5], 4
      %s2238 = int_to_ptr.vmem [resolvable:$true] %s2237
      %2240 = dma.vmem_to_hbm [thread:$0]  %s2238, 128, %s2, [#allocation4]
    $region17: #{tpu_custom_call.1} parent=1 // pred_fallthru
      _
    // Predicated region
    $region18: #{tpu_custom_call.1} parent=1 // pred_check
      _
    $region19: #{tpu_custom_call.1} parent=1 // pred_check_branch
      %2242 = sbr.rel (0) target = $region21
    $region20: #{tpu_custom_call.1} parent=1 // pred_region
      %2243 = dma.done [#allocation4], 128
    $region21: #{tpu_custom_call.1} parent=1 // pred_fallthru
      _
    %2244 = vsyncpa [#allocation3], 1
    %2245 = vsyncpa [#allocation4], 1

</llo_original>
